<compile_context>
chip_gen: v6e
topology: v6e:2x2x1
jax: 0.10.0
libtpu: 0.0.40
codegen_flags: <defaults>
</compile_context>

<pallas_src>
import functools
import math

import jax
import jax.numpy as jnp
from jax import lax
from jax.experimental import pallas as pl
from jax.experimental.pallas import tpu as pltpu

_LANE = 128
_NEG_BIG = -1e30
_PAD_BATCH = 2 ** 30  # sentinel event id for padded tokens (>= any real id)


def _round_up(x, m):
    return ((x + m - 1) // m) * m


def _vmem_limit_bytes():
    """Generation-aware VMEM scoped limit: ~48 MiB on v7x (64 MiB physical),
    up to 112 MiB on v5e/v6e (128 MiB physical). Safe fallback if query fails."""
    try:
        phys = int(pltpu.get_tpu_info().vmem_capacity_bytes)
        return max(32 << 20, min(phys - (16 << 20), 112 << 20))
    except Exception:
        return 48 << 20


# --------------------------------------------------------------------------
# Kernel 1: input projection + fused QKV projection (tiled over tokens)
# --------------------------------------------------------------------------
def _qkv_project_kernel(x_ref, w_in_ref, w_qkv_ref, q_ref, k_ref, v_ref, *, h_p):
    x = x_ref[...]                                                      # (t, Dp) bf16
    h = jnp.dot(x, w_in_ref[...], preferred_element_type=jnp.float32)   # (t, Hp) f32
    h = h.astype(jnp.bfloat16)
    # one wide MXU matmul instead of three narrow ones
    qkv = jnp.dot(h, w_qkv_ref[...],
                  preferred_element_type=jnp.float32)                   # (t, 3*Hp) f32
    # h_p is a multiple of 128 -> lane-aligned slices, no relayout
    q_ref[...] = qkv[:, :h_p].astype(jnp.bfloat16)
    k_ref[...] = qkv[:, h_p:2 * h_p].astype(jnp.bfloat16)
    v_ref[...] = qkv[:, 2 * h_p:].astype(jnp.bfloat16)


# --------------------------------------------------------------------------
# Kernel 2: block-diagonal masked flash attention + fused output projection
#   grid = (q tiles, max kv-window length); kv axis walks only the window of
#   kv tiles whose event range can overlap the q tile (scalar-prefetched).
# --------------------------------------------------------------------------
def _flash_block_diag_kernel(kvs_ref, kvn_ref, q_ref, k_ref, v_ref,
                             bq_ref, bk_ref, w_o_ref, out_ref,
                             m_sc, l_sc, acc_sc, *, scale):
    qi = pl.program_id(0)
    ki = pl.program_id(1)

    @pl.when(ki == 0)
    def _init():
        m_sc[...] = jnp.full_like(m_sc, _NEG_BIG)
        l_sc[...] = jnp.zeros_like(l_sc)
        acc_sc[...] = jnp.zeros_like(acc_sc)

    # Steps past this q tile's kv window are no-ops (their index_maps are
    # clamped, so they issue no new DMAs either).  The dense elementwise mask
    # below guarantees correctness inside the window (tiles can straddle
    # event boundaries).
    @pl.when(ki < kvn_ref[qi])
    def _compute():
        q = q_ref[...]                                                  # (tq, Hp) bf16
        k = k_ref[...]                                                  # (tk, Hp) bf16
        # QK^T with transposed contraction (no materialized k.T)
        s = lax.dot_general(q, k, (((1,), (1,)), ((), ())),
                            preferred_element_type=jnp.float32) * scale  # (tq, tk)

        mask = bq_ref[...] == bk_ref[...]                               # (tq,1)==(1,tk)
        s = jnp.where(mask, s, _NEG_BIG)

        m_prev = m_sc[...]
        m_new = jnp.maximum(m_prev, jnp.max(s, axis=-1, keepdims=True))
        alpha = jnp.exp(m_prev - m_new)
        # mask p explicitly so rows with no match in this tile contribute 0
        # (safe even while the running max is still the -1e30 init).
        p = jnp.where(mask, jnp.exp(s - m_new), 0.0)                    # (tq, tk) f32
        l_sc[...] = alpha * l_sc[...] + jnp.sum(p, axis=-1, keepdims=True)
        acc_sc[...] = alpha * acc_sc[...] + jnp.dot(
            p.astype(jnp.bfloat16), v_ref[...],
            preferred_element_type=jnp.float32)
        m_sc[...] = m_new

    @pl.when(ki == pl.num_programs(1) - 1)
    def _finalize():
        # every token (pads form their own fake event) attends at least to
        # itself, so l > 0.  approx reciprocal ~1e-3 rel err on the softmax
        # denominator; switch to approx=False if logits feed a calibrated loss.
        o = acc_sc[...] * pl.reciprocal(l_sc[...], approx=True)         # (tq, Hp) f32
        out_ref[...] = jnp.dot(o.astype(jnp.bfloat16), w_o_ref[...],
                               preferred_element_type=jnp.float32
                               ).astype(out_ref.dtype)                  # bf16 writeback


# --------------------------------------------------------------------------
# Wrapper: TaggingGATrWrapper.forward (mean_aggregation=False path)
# --------------------------------------------------------------------------
def tagging_gatr_forward(mv, s, batch, is_global_idx, params,
                         *, tq=128, tk=128, t1=None):
    """mv: (N, C_mv, 16), s: (N, C_s), batch: (N,) int (nondecreasing),
    is_global_idx: (B,) int (static-shape equivalent of the boolean is_global
    mask). Returns logits (B, C_mv_out).

    Tile knobs: tq=tk=128 is safe on all generations (v5e's 4x128^2 MXU);
    sweep tk=256 on v6e/v7x for full MXU output width."""
    assert tq % 16 == 0 and tk % _LANE == 0, \
        "tq must be a multiple of 16 (bf16 sublanes), tk a multiple of 128"

    N = mv.shape[0]
    c_mv_out = params["c_mv_out"]
    hidden = params["w_q"].shape[0]          # real (unpadded) hidden width
    d_out = params["w_o"].shape[1]

    # ---- glue outside the hot path: flatten mv + concat scalars, pad to
    # lane-dense 128 multiples, cast matmul operands to bf16.
    x = jnp.concatenate([mv.reshape(N, -1), s], axis=-1).astype(jnp.float32)
    d_in = x.shape[1]

    d_in_p = _round_up(d_in, _LANE)
    h_p = _round_up(hidden, _LANE)
    d_out_p = _round_up(d_out, _LANE)
    n_p = _round_up(N, math.lcm(tq, tk))

    def pad2(a, r, c):
        a = a.astype(jnp.float32)
        return jnp.pad(a, ((0, r - a.shape[0]), (0, c - a.shape[1])))

    x_p = pad2(x, n_p, d_in_p).astype(jnp.bfloat16)
    w_in = pad2(params["w_in"], d_in_p, h_p).astype(jnp.bfloat16)
    # fused QKV weight
    w_qkv = jnp.concatenate(
        [pad2(params["w_q"], h_p, h_p),
         pad2(params["w_k"], h_p, h_p),
         pad2(params["w_v"], h_p, h_p)], axis=1).astype(jnp.bfloat16)   # (h_p, 3*h_p)
    w_o = pad2(params["w_o"], h_p, d_out_p).astype(jnp.bfloat16)

    b = batch.astype(jnp.int32)
    b_pad = jnp.concatenate(
        [b, jnp.full((n_p - N,), _PAD_BATCH, jnp.int32)])               # (n_p,)
    b_col = b_pad.reshape(n_p, 1)                                       # (n_p, 1)
    b_row = b_pad.reshape(1, n_p)                                       # (1, n_p)

    vmem_limit = _vmem_limit_bytes()

    # ---- kernel 1: fused QKV projection, weights resident, big token tiles
    if t1 is None:
        t1 = next(c for c in (512, 256, 128) if n_p % c == 0)
    assert n_p % t1 == 0 and t1 % 16 == 0

    cost1 = pl.CostEstimate(
        flops=2 * n_p * d_in_p * h_p + 2 * n_p * h_p * (3 * h_p),
        transcendentals=0,
        bytes_accessed=(n_p * d_in_p * 2 + d_in_p * h_p * 2
                        + h_p * 3 * h_p * 2 + 3 * n_p * h_p * 2))

    q, k, v = pl.pallas_call(
        functools.partial(_qkv_project_kernel, h_p=h_p),
        out_shape=tuple(jax.ShapeDtypeStruct((n_p, h_p), jnp.bfloat16)
                        for _ in range(3)),
        grid_spec=pltpu.PrefetchScalarGridSpec(
            num_scalar_prefetch=0,
            grid=(n_p // t1,),
            in_specs=[
                pl.BlockSpec((t1, d_in_p), lambda i: (i, 0)),
                pl.BlockSpec((d_in_p, h_p), lambda i: (0, 0)),       # resident
                pl.BlockSpec((h_p, 3 * h_p), lambda i: (0, 0)),      # resident
            ],
            out_specs=[
                pl.BlockSpec((t1, h_p), lambda i: (i, 0)),
                pl.BlockSpec((t1, h_p), lambda i: (i, 0)),
                pl.BlockSpec((t1, h_p), lambda i: (i, 0)),
            ],
        ),
        compiler_params=pltpu.CompilerParams(
            dimension_semantics=("parallel",), vmem_limit_bytes=vmem_limit),
        cost_estimate=cost1,
    )(x_p, w_in, w_qkv)

    # ---- per-q-tile kv window from the nondecreasing batch index
    n_q_tiles = n_p // tq
    n_kv_tiles_total = n_p // tk
    q_starts = jnp.arange(n_q_tiles, dtype=jnp.int32) * tq
    bq_lo = b_pad[q_starts]
    bq_hi = b_pad[q_starts + (tq - 1)]
    kv_first = jnp.searchsorted(b_pad, bq_lo, side="left").astype(jnp.int32)
    kv_last = (jnp.searchsorted(b_pad, bq_hi, side="right") - 1).astype(jnp.int32)
    kv_start_tile = (kv_first // tk).astype(jnp.int32)                  # (n_q_tiles,)
    kv_num_tiles = (kv_last // tk - kv_start_tile + 1).astype(jnp.int32)

    try:
        # eager path: tight static kv-grid bound (cuts grid steps ~E x)
        max_kv = int(jnp.max(kv_num_tiles))
    except (jax.errors.ConcretizationTypeError, TypeError):
        # traced under jit: conservative bound; window clamp still removes
        # the redundant K/V DMAs even though the step count stays O(N^2/tk).
        max_kv = n_kv_tiles_total
    max_kv = max(1, min(max_kv, n_kv_tiles_total))

    # ---- kernel 2: windowed flash attention + fused out projection
    scale = 1.0 / float(hidden) ** 0.5
    grid = (n_q_tiles, max_kv)

    def _kv_idx(qi, ki, kvs, kvn):
        # clamp past the window end: repeated block index -> no extra DMA
        return (kvs[qi] + jnp.minimum(ki, kvn[qi] - 1), 0)

    def _bk_idx(qi, ki, kvs, kvn):
        return (0, kvs[qi] + jnp.minimum(ki, kvn[qi] - 1))

    cost2 = pl.CostEstimate(
        flops=4 * n_q_tiles * max_kv * tq * tk * h_p + 2 * n_p * h_p * d_out_p,
        transcendentals=n_q_tiles * max_kv * tq * tk,
        bytes_accessed=(n_p * h_p * 2                             # q stream
                        + 2 * n_q_tiles * max_kv * tk * h_p * 2   # windowed k + v
                        + n_p * d_out_p * 2                       # bf16 output
                        + h_p * d_out_p * 2                       # w_o
                        + 2 * n_p * 4 + 2 * n_q_tiles * 4),       # batch ids + windows
    )

    out = pl.pallas_call(
        functools.partial(_flash_block_diag_kernel, scale=scale),
        out_shape=jax.ShapeDtypeStruct((n_p, d_out_p), jnp.bfloat16),
        grid_spec=pltpu.PrefetchScalarGridSpec(
            num_scalar_prefetch=2,              # kv_start_tile, kv_num_tiles -> SMEM
            grid=grid,
            in_specs=[
                pl.BlockSpec((tq, h_p), lambda qi, ki, kvs, kvn: (qi, 0)),      # q
                pl.BlockSpec((tk, h_p), _kv_idx),                               # k
                pl.BlockSpec((tk, h_p), _kv_idx),                               # v
                pl.BlockSpec((tq, 1), lambda qi, ki, kvs, kvn: (qi, 0)),        # batch (q)
                pl.BlockSpec((1, tk), _bk_idx),                                 # batch (kv)
                pl.BlockSpec((h_p, d_out_p), lambda qi, ki, kvs, kvn: (0, 0)),  # w_o resident
            ],
            out_specs=pl.BlockSpec((tq, d_out_p), lambda qi, ki, kvs, kvn: (qi, 0)),
            scratch_shapes=[
                pltpu.VMEM((tq, 1), jnp.float32),       # running max m
                pltpu.VMEM((tq, 1), jnp.float32),       # running denom l
                pltpu.VMEM((tq, h_p), jnp.float32),     # output accumulator
            ],
        ),
        compiler_params=pltpu.CompilerParams(
            dimension_semantics=("parallel", "arbitrary"),
            vmem_limit_bytes=vmem_limit),
        cost_estimate=cost2,
    )(kv_start_tile, kv_num_tiles, q, k, v, b_col, b_row, w_o)

    # ---- extract_from_ga: grade-0 component, then select global tokens
    out = out[:N, :d_out].astype(jnp.float32)
    mv_out = out[:, : c_mv_out * 16].reshape(N, c_mv_out, 16)
    outputs = mv_out[:, :, 0]                                           # (N, C_mv_out)
    logits = outputs[is_global_idx]                                     # (B, C_mv_out)
    return logits


def make_params(key, d_in, hidden, c_mv_out, c_s_out):
    ks = jax.random.split(key, 5)
    d_out = c_mv_out * 16 + c_s_out
    scale = 0.1
    return {
        "w_in": scale * jax.random.normal(ks[0], (d_in, hidden), jnp.float32),
        "w_q":  scale * jax.random.normal(ks[1], (hidden, hidden), jnp.float32),
        "w_k":  scale * jax.random.normal(ks[2], (hidden, hidden), jnp.float32),
        "w_v":  scale * jax.random.normal(ks[3], (hidden, hidden), jnp.float32),
        "w_o":  scale * jax.random.normal(ks[4], (hidden, d_out), jnp.float32),
        "c_mv_out": c_mv_out,
    }


def _reference(mv, s, batch, is_global_idx, params):
    """Pure-JAX f32 reference of the same stand-in net + extraction."""
    N = mv.shape[0]
    x = jnp.concatenate([mv.reshape(N, -1), s], axis=-1).astype(jnp.float32)
    h = x @ params["w_in"]
    q = h @ params["w_q"]
    k = h @ params["w_k"]
    v = h @ params["w_v"]
    scores = (q @ k.T) / jnp.sqrt(jnp.float32(params["w_q"].shape[0]))
    mask = batch[:, None] == batch[None, :]
    scores = jnp.where(mask, scores, _NEG_BIG)
    attn = jax.nn.softmax(scores, axis=-1)
    out = (attn @ v) @ params["w_o"]
    mv_out = out[:, : params["c_mv_out"] * 16].reshape(N, params["c_mv_out"], 16)
    return mv_out[:, :, 0][is_global_idx]


if __name__ == "__main__":
    key = jax.random.PRNGKey(0)

    # small shapes: B=2 events, 80 tokens per event -> N=160 tokens (pads to
    # 256 = 2x2 grid of 128-token tiles, exercising the windowed online
    # softmax, the cross-tile block-diagonal mask, and the even q-tile count
    # needed for v7x megacore).
    B = 2
    tokens_per_event = 80
    N = B * tokens_per_event
    C_MV, C_S = 2, 3            # input multivector / scalar channels
    HIDDEN = 32
    C_MV_OUT, C_S_OUT = 2, 1    # output channels (C_MV_OUT = number of classes)
    D_IN = C_MV * 16 + C_S

    k_mv, k_s, k_p = jax.random.split(key, 3)
    mv = jax.random.normal(k_mv, (N, C_MV, 16), jnp.float32)      # embedding['mv']
    s = jax.random.normal(k_s, (N, C_S), jnp.float32)             # embedding['s']
    batch = jnp.repeat(jnp.arange(B, dtype=jnp.int32), tokens_per_event)
    # global token = first token of each event (boolean is_global -> static idx)
    is_global_idx = jnp.arange(B, dtype=jnp.int32) * tokens_per_event

    params = make_params(k_p, D_IN, HIDDEN, C_MV_OUT, C_S_OUT)

    logits = tagging_gatr_forward(mv, s, batch, is_global_idx, params)
    logits = jax.block_until_ready(logits)
    assert logits.shape == (B, C_MV_OUT), logits.shape

    ref = jax.block_until_ready(_reference(mv, s, batch, is_global_idx, params))
    max_err = float(jnp.max(jnp.abs(logits - ref)))
    assert max_err < 5e-2, f"max abs err {max_err} vs f32 reference"

    print("KERNEL_OK")
</pallas_src>

<mosaic_0001>
module attributes {stable_mosaic.version = 11 : i64} {
  func.func @_qkv_project_kernel(%arg0: i32, %arg1: memref<256x128xbf16, #tpu.memory_space<vmem>>, %arg2: memref<128x128xbf16, #tpu.memory_space<vmem>>, %arg3: memref<128x384xbf16, #tpu.memory_space<vmem>>, %arg4: memref<256x128xbf16, #tpu.memory_space<vmem>>, %arg5: memref<256x128xbf16, #tpu.memory_space<vmem>>, %arg6: memref<256x128xbf16, #tpu.memory_space<vmem>>) attributes {dimension_semantics = [#tpu.dimension_semantics<parallel>], iteration_bounds = array<i64: 1>, scalar_prefetch = 0 : i64, scratch_operands = 0 : i64, tpu.core_type = #tpu.core_type<tc>, window_params = [{transform_indices = @transform_0, window_bounds = array<i64: 256, 128>}, {pipeline_mode = #tpu.pipeline_mode<synchronous>, transform_indices = @transform_1, window_bounds = array<i64: 128, 128>}, {pipeline_mode = #tpu.pipeline_mode<synchronous>, transform_indices = @transform_2, window_bounds = array<i64: 128, 384>}, {transform_indices = @transform_3, window_bounds = array<i64: 256, 128>}, {transform_indices = @transform_4, window_bounds = array<i64: 256, 128>}, {transform_indices = @transform_5, window_bounds = array<i64: 256, 128>}]} {
    %c0 = arith.constant 0 : index
    %c0_0 = arith.constant 0 : index
    %0 = vector.load %arg1[%c0, %c0_0] : memref<256x128xbf16, #tpu.memory_space<vmem>>, vector<256x128xbf16>
    %c0_1 = arith.constant 0 : index
    %c0_2 = arith.constant 0 : index
    %1 = vector.load %arg2[%c0_1, %c0_2] : memref<128x128xbf16, #tpu.memory_space<vmem>>, vector<128x128xbf16>
    %cst = arith.constant dense<0.000000e+00> : vector<256x128xf32>
    %2 = tpu.matmul %0, %1, %cst {dimension_numbers = #tpu.dot_dimension_numbers<[1], [0], [0], [1], [0, 0, 1, 1], [], []>} : vector<256x128xbf16>, vector<128x128xbf16>, vector<256x128xf32> -> vector<256x128xf32>
    %3 = arith.truncf %2 : vector<256x128xf32> to vector<256x128xbf16>
    %c0_3 = arith.constant 0 : index
    %c0_4 = arith.constant 0 : index
    %4 = vector.load %arg3[%c0_3, %c0_4] : memref<128x384xbf16, #tpu.memory_space<vmem>>, vector<128x384xbf16>
    %cst_5 = arith.constant dense<0.000000e+00> : vector<256x384xf32>
    %5 = tpu.matmul %3, %4, %cst_5 {dimension_numbers = #tpu.dot_dimension_numbers<[1], [0], [0], [1], [0, 0, 1, 1], [], []>} : vector<256x128xbf16>, vector<128x384xbf16>, vector<256x384xf32> -> vector<256x384xf32>
    %6 = vector.extract_strided_slice %5 {offsets = [0, 0], sizes = [256, 128], strides = [1, 1]} : vector<256x384xf32> to vector<256x128xf32>
    %7 = arith.truncf %6 : vector<256x128xf32> to vector<256x128xbf16>
    %c0_6 = arith.constant 0 : index
    %c0_7 = arith.constant 0 : index
    %8 = vector.load %arg4[%c0_6, %c0_7] : memref<256x128xbf16, #tpu.memory_space<vmem>>, vector<256x128xbf16>
    tpu.vector_store %arg4[%c0_6, %c0_7], %7 {strides = array<i32>} : memref<256x128xbf16, #tpu.memory_space<vmem>>, vector<256x128xbf16>,
    %9 = vector.extract_strided_slice %5 {offsets = [0, 128], sizes = [256, 128], strides = [1, 1]} : vector<256x384xf32> to vector<256x128xf32>
    %10 = arith.truncf %9 : vector<256x128xf32> to vector<256x128xbf16>
    %c0_8 = arith.constant 0 : index
    %c0_9 = arith.constant 0 : index
    %11 = vector.load %arg5[%c0_8, %c0_9] : memref<256x128xbf16, #tpu.memory_space<vmem>>, vector<256x128xbf16>
    tpu.vector_store %arg5[%c0_8, %c0_9], %10 {strides = array<i32>} : memref<256x128xbf16, #tpu.memory_space<vmem>>, vector<256x128xbf16>,
    %12 = vector.extract_strided_slice %5 {offsets = [0, 256], sizes = [256, 128], strides = [1, 1]} : vector<256x384xf32> to vector<256x128xf32>
    %13 = arith.truncf %12 : vector<256x128xf32> to vector<256x128xbf16>
    %c0_10 = arith.constant 0 : index
    %c0_11 = arith.constant 0 : index
    %14 = vector.load %arg6[%c0_10, %c0_11] : memref<256x128xbf16, #tpu.memory_space<vmem>>, vector<256x128xbf16>
    tpu.vector_store %arg6[%c0_10, %c0_11], %13 {strides = array<i32>} : memref<256x128xbf16, #tpu.memory_space<vmem>>, vector<256x128xbf16>,
    return
  }
  func.func @transform_0(%arg0: i32) -> (i32, i32) {
    %c0_i32 = arith.constant 0 : i32
    %c0_i32_0 = arith.constant 0 : i32
    return %arg0, %c0_i32 : i32, i32
  }
  func.func @transform_1(%arg0: i32) -> (i32, i32) {
    %c0_i32 = arith.constant 0 : i32
    %c0_i32_0 = arith.constant 0 : i32
    %c0_i32_1 = arith.constant 0 : i32
    return %c0_i32, %c0_i32_0 : i32, i32
  }
  func.func @transform_2(%arg0: i32) -> (i32, i32) {
    %c0_i32 = arith.constant 0 : i32
    %c0_i32_0 = arith.constant 0 : i32
    %c0_i32_1 = arith.constant 0 : i32
    return %c0_i32, %c0_i32_0 : i32, i32
  }
  func.func @transform_3(%arg0: i32) -> (i32, i32) {
    %c0_i32 = arith.constant 0 : i32
    %c0_i32_0 = arith.constant 0 : i32
    return %arg0, %c0_i32 : i32, i32
  }
  func.func @transform_4(%arg0: i32) -> (i32, i32) {
    %c0_i32 = arith.constant 0 : i32
    %c0_i32_0 = arith.constant 0 : i32
    return %arg0, %c0_i32 : i32, i32
  }
  func.func @transform_5(%arg0: i32) -> (i32, i32) {
    %c0_i32 = arith.constant 0 : i32
    %c0_i32_0 = arith.constant 0 : i32
    return %arg0, %c0_i32 : i32, i32
  }
}

</mosaic_0001>

<llo_original>
// kernel: tpu_custom_call.1
$region0: #{tpu_custom_call.1}
  #allocation0 [shape = 'u32[]', space=smem, size = 0x4, offset = 0x4, fixed_abs, tag = 'smem constant byte address 0x4 - core index']
  #allocation1 [shape = 'u32[144,128]{1,0:T(1,128)}', space=vmem, size = 0x12000, scoped, tag = 'internal scratch']
  %s0 = inlined_call_operand.hbm [shape: bf16[256,128], index: 0, kind: input, shape index: {}]
  %s1 = inlined_call_operand.hbm [shape: bf16[128,128], index: 1, kind: input, shape index: {}]
  %s2 = inlined_call_operand.hbm [shape: bf16[128,384], index: 2, kind: input, shape index: {}]
  %s3 = inlined_call_operand.hbm [shape: bf16[256,128], index: 3, kind: output, shape index: {0}]
  %s4 = inlined_call_operand.hbm [shape: bf16[256,128], index: 4, kind: output, shape index: {1}]
  %s5 = inlined_call_operand.hbm [shape: bf16[256,128], index: 5, kind: output, shape index: {2}]
  %6 = xla_tuple %s3, %s4, %s5
  %s7 = sld [smem:[#allocation0]]
  $region50: #{tpu_custom_call.1} parent=0
    _
  %s9 = ssub.s32 1, %s7
  %s10 = scalar_select 0, %s9, %s7
  $region1: #{tpu_custom_call.1} parent=0
    #allocation2 [shape = 'u8[65536]{0}', space=vmem, size = 0x10000, scoped, tag = 'input window, operand 0, single buffered']
    #allocation3 [shape = 's32[1]{0}', space=sflag, size = 0x4, scoped, tag = 'scoped memory for tpu_custom_call.1']
    #allocation4 [shape = 's32[1]{0}', space=sflag, size = 0x4, scoped, tag = 'scoped memory for tpu_custom_call.1']
    #allocation5 [shape = 'u8[32768]{0}', space=vmem, size = 0x8000, scoped, tag = 'input window, operand 1, single buffered']
    #allocation6 [shape = 's32[1]{0}', space=sflag, size = 0x4, scoped, tag = 'scoped memory for tpu_custom_call.1']
    #allocation7 [shape = 'u8[98304]{0}', space=vmem, size = 0x18000, scoped, tag = 'input window, operand 2, single buffered']
    #allocation8 [shape = 'u8[65536]{0}', space=vmem, size = 0x10000, scoped, tag = 'output window, operand 0, single buffered']
    #allocation9 [shape = 'u8[65536]{0}', space=vmem, size = 0x10000, scoped, tag = 'output window, operand 1, single buffered']
    #allocation10 [shape = 's32[1]{0}', space=sflag, size = 0x4, scoped, tag = 'scoped memory for tpu_custom_call.1']
    #allocation11 [shape = 'u8[65536]{0}', space=vmem, size = 0x10000, scoped, tag = 'output window, operand 2, single buffered']
    %11 = vsyncpa [#allocation3], 0
    %12 = vsyncpa [#allocation6], 0
    %13 = vsyncpa [#allocation4], 0
    %14 = vsyncpa [#allocation10], 0
    // Predicated region
    $region2: #{tpu_custom_call.1} parent=1 // pred_check
      _
    $region3: #{tpu_custom_call.1} parent=1 // pred_check_branch
      %16 = sbr.rel (0) target = $region5
    $region4: #{tpu_custom_call.1} parent=1 // pred_region
      %s18 = ssub.s32 2048, 2048
      %19 = vsyncadd [#allocation3], %s18
      %s20 = sshll.u32 [#allocation2], 4
      %s21 = int_to_ptr.vmem [resolvable:$true] %s20
      %26 = dma.hbm_to_vmem [thread:$0]  %s0, 2048, %s21, [#allocation3], 64, 64, 4
    $region5: #{tpu_custom_call.1} parent=1 // pred_fallthru
      _
    // Predicated region
    $region6: #{tpu_custom_call.1} parent=1 // pred_check
      _
    $region7: #{tpu_custom_call.1} parent=1 // pred_check_branch
      %28 = sbr.rel (0) target = $region9
    $region8: #{tpu_custom_call.1} parent=1 // pred_region
      %s30 = ssub.s32 1024, 1024
      %31 = vsyncadd [#allocation6], %s30
      %s32 = sshll.u32 [#allocation5], 4
      %s33 = int_to_ptr.vmem [resolvable:$true] %s32
      %38 = dma.hbm_to_vmem [thread:$0]  %s1, 1024, %s33, [#allocation6], 64, 64, 4
    $region9: #{tpu_custom_call.1} parent=1 // pred_fallthru
      _
    // Predicated region
    $region10: #{tpu_custom_call.1} parent=1 // pred_check
      _
    $region11: #{tpu_custom_call.1} parent=1 // pred_check_branch
      %40 = sbr.rel (0) target = $region13
    $region12: #{tpu_custom_call.1} parent=1 // pred_region
      %s42 = ssub.s32 3072, 3072
      %43 = vsyncadd [#allocation6], %s42
      %s44 = sshll.u32 [#allocation7], 4
      %s45 = int_to_ptr.vmem [resolvable:$true] %s44
      %50 = dma.hbm_to_vmem [thread:$0]  %s2, 3072, %s45, [#allocation6], 192, 192, 12
    $region13: #{tpu_custom_call.1} parent=1 // pred_fallthru
      _
    // Predicated region
    $region14: #{tpu_custom_call.1} parent=1 // pred_check
      _
    $region15: #{tpu_custom_call.1} parent=1 // pred_check_branch
      %52 = sbr.rel (0) target = $region17
    $region16: #{tpu_custom_call.1} parent=1 // pred_region
      %53 = dma.done [#allocation3], 2048
    $region17: #{tpu_custom_call.1} parent=1 // pred_fallthru
      _
    // Predicated region
    $region18: #{tpu_custom_call.1} parent=1 // pred_check
      _
    $region19: #{tpu_custom_call.1} parent=1 // pred_check_branch
      %55 = sbr.rel (0) target = $region21
    $region20: #{tpu_custom_call.1} parent=1 // pred_region
      %56 = dma.done [#allocation6], 1024
    $region21: #{tpu_custom_call.1} parent=1 // pred_fallthru
      _
    // Predicated region
    $region22: #{tpu_custom_call.1} parent=1 // pred_check
      _
    $region23: #{tpu_custom_call.1} parent=1 // pred_check_branch
      %58 = sbr.rel (0) target = $region25
    $region24: #{tpu_custom_call.1} parent=1 // pred_region
      %59 = dma.done [#allocation6], 3072
    $region25: #{tpu_custom_call.1} parent=1 // pred_fallthru
      _
    %v61 = vld [vmem:[#allocation2] sm:$0xf]
    %v62 = vld [vmem:[#allocation2 + $0x4] sm:$0xf]
    %v63 = vld [vmem:[#allocation2 + $0x8] sm:$0xf]
    %v64 = vld [vmem:[#allocation2 + $0xc] sm:$0xf]
    %v65 = vld [vmem:[#allocation2 + $0x10] sm:$0xf]
    %v66 = vld [vmem:[#allocation2 + $0x14] sm:$0xf]
    %v67 = vld [vmem:[#allocation2 + $0x18] sm:$0xf]
    %v68 = vld [vmem:[#allocation2 + $0x1c] sm:$0xf]
    %v69 = vld [vmem:[#allocation2 + $0x20] sm:$0xf]
    %v70 = vld [vmem:[#allocation2 + $0x24] sm:$0xf]
    %v71 = vld [vmem:[#allocation2 + $0x28] sm:$0xf]
    %v72 = vld [vmem:[#allocation2 + $0x2c] sm:$0xf]
    %v73 = vld [vmem:[#allocation2 + $0x30] sm:$0xf]
    %v74 = vld [vmem:[#allocation2 + $0x34] sm:$0xf]
    %v75 = vld [vmem:[#allocation2 + $0x38] sm:$0xf]
    %v76 = vld [vmem:[#allocation2 + $0x3c] sm:$0xf]
    %v77 = vld [vmem:[#allocation2 + $0x40] sm:$0xf]
    %v78 = vld [vmem:[#allocation2 + $0x44] sm:$0xf]
    %v79 = vld [vmem:[#allocation2 + $0x48] sm:$0xf]
    %v80 = vld [vmem:[#allocation2 + $0x4c] sm:$0xf]
    %v81 = vld [vmem:[#allocation2 + $0x50] sm:$0xf]
    %v82 = vld [vmem:[#allocation2 + $0x54] sm:$0xf]
    %v83 = vld [vmem:[#allocation2 + $0x58] sm:$0xf]
    %v84 = vld [vmem:[#allocation2 + $0x5c] sm:$0xf]
    %v85 = vld [vmem:[#allocation2 + $0x60] sm:$0xf]
    %v86 = vld [vmem:[#allocation2 + $0x64] sm:$0xf]
    %v87 = vld [vmem:[#allocation2 + $0x68] sm:$0xf]
    %v88 = vld [vmem:[#allocation2 + $0x6c] sm:$0xf]
    %v89 = vld [vmem:[#allocation2 + $0x70] sm:$0xf]
    %v90 = vld [vmem:[#allocation2 + $0x74] sm:$0xf]
    %v91 = vld [vmem:[#allocation2 + $0x78] sm:$0xf]
    %v92 = vld [vmem:[#allocation2 + $0x7c] sm:$0xf]
    %v93 = vld [vmem:[#allocation5] sm:$0xf]
    %v94 = vld [vmem:[#allocation5 + $0x4] sm:$0xf]
    %v95 = vld [vmem:[#allocation5 + $0x8] sm:$0xf]
    %v96 = vld [vmem:[#allocation5 + $0xc] sm:$0xf]
    %v97 = vld [vmem:[#allocation5 + $0x10] sm:$0xf]
    %v98 = vld [vmem:[#allocation5 + $0x14] sm:$0xf]
    %v99 = vld [vmem:[#allocation5 + $0x18] sm:$0xf]
    %v100 = vld [vmem:[#allocation5 + $0x1c] sm:$0xf]
    %v101 = vld [vmem:[#allocation5 + $0x20] sm:$0xf]
    %v102 = vld [vmem:[#allocation5 + $0x24] sm:$0xf]
    %v103 = vld [vmem:[#allocation5 + $0x28] sm:$0xf]
    %v104 = vld [vmem:[#allocation5 + $0x2c] sm:$0xf]
    %v105 = vld [vmem:[#allocation5 + $0x30] sm:$0xf]
    %v106 = vld [vmem:[#allocation5 + $0x34] sm:$0xf]
    %v107 = vld [vmem:[#allocation5 + $0x38] sm:$0xf]
    %v108 = vld [vmem:[#allocation5 + $0x3c] sm:$0xf]
    %v141 = vunpack.c.l.b16 %v61
    %v142 = vunpack.c.l.b16 %v62
    %v143 = vunpack.c.l.b16 %v63
    %v144 = vunpack.c.l.b16 %v64
    %v145 = vunpack.c.l.b16 %v65
    %v146 = vunpack.c.l.b16 %v66
    %v147 = vunpack.c.l.b16 %v67
    %v148 = vunpack.c.l.b16 %v68
    %v149 = vunpack.c.l.b16 %v69
    %v150 = vunpack.c.l.b16 %v70
    %v151 = vunpack.c.l.b16 %v71
    %v152 = vunpack.c.l.b16 %v72
    %v153 = vunpack.c.l.b16 %v73
    %v154 = vunpack.c.l.b16 %v74
    %v155 = vunpack.c.l.b16 %v75
    %v156 = vunpack.c.l.b16 %v76
    %v157 = vunpack.c.l.b16 %v77
    %v158 = vunpack.c.l.b16 %v78
    %v159 = vunpack.c.l.b16 %v79
    %v160 = vunpack.c.l.b16 %v80
    %v161 = vunpack.c.l.b16 %v81
    %v162 = vunpack.c.l.b16 %v82
    %v163 = vunpack.c.l.b16 %v83
    %v164 = vunpack.c.l.b16 %v84
    %v165 = vunpack.c.l.b16 %v85
    %v166 = vunpack.c.l.b16 %v86
    %v167 = vunpack.c.l.b16 %v87
    %v168 = vunpack.c.l.b16 %v88
    %v169 = vunpack.c.l.b16 %v89
    %v170 = vunpack.c.l.b16 %v90
    %v171 = vunpack.c.l.b16 %v91
    %v172 = vunpack.c.l.b16 %v92
    %v173 = vpack.c.b16 %v142, %v141
    %v174 = vpack.c.b16 %v144, %v143
    %v175 = vpack.c.b16 %v146, %v145
    %v176 = vpack.c.b16 %v148, %v147
    %v177 = vpack.c.b16 %v150, %v149
    %v178 = vpack.c.b16 %v152, %v151
    %v179 = vpack.c.b16 %v154, %v153
    %v180 = vpack.c.b16 %v156, %v155
    %v181 = vpack.c.b16 %v158, %v157
    %v182 = vpack.c.b16 %v160, %v159
    %v183 = vpack.c.b16 %v162, %v161
    %v184 = vpack.c.b16 %v164, %v163
    %v185 = vpack.c.b16 %v166, %v165
    %v186 = vpack.c.b16 %v168, %v167
    %v187 = vpack.c.b16 %v170, %v169
    %v188 = vpack.c.b16 %v172, %v171
    %v221 = vunpack.c.l.b16 %v93
    %v222 = vunpack.c.l.b16 %v94
    %v223 = vunpack.c.l.b16 %v95
    %v224 = vunpack.c.l.b16 %v96
    %v225 = vunpack.c.l.b16 %v97
    %v226 = vunpack.c.l.b16 %v98
    %v227 = vunpack.c.l.b16 %v99
    %v228 = vunpack.c.l.b16 %v100
    %v229 = vunpack.c.l.b16 %v101
    %v230 = vunpack.c.l.b16 %v102
    %v231 = vunpack.c.l.b16 %v103
    %v232 = vunpack.c.l.b16 %v104
    %v233 = vunpack.c.l.b16 %v105
    %v234 = vunpack.c.l.b16 %v106
    %v235 = vunpack.c.l.b16 %v107
    %v236 = vunpack.c.l.b16 %v108
    %v237 = vpack.c.b16 %v222, %v221
    %v238 = vpack.c.b16 %v224, %v223
    %v239 = vpack.c.b16 %v226, %v225
    %v240 = vpack.c.b16 %v228, %v227
    %v241 = vpack.c.b16 %v230, %v229
    %v242 = vpack.c.b16 %v232, %v231
    %v243 = vpack.c.b16 %v234, %v233
    %v244 = vpack.c.b16 %v236, %v235
    %253 = vmatprep.subr.bf16.mxu0 0
    %254 = vmatpush1.bf16.msra.mxu0 %v244
    %255 = vmatprep.subr.bf16.mxu0 0
    %256 = vmatpush1.bf16.msra.mxu0 %v243
    %257 = vmatprep.subr.bf16.mxu0 0
    %258 = vmatpush1.bf16.msra.mxu0 %v242
    %259 = vmatprep.subr.bf16.mxu0 0
    %260 = vmatpush1.bf16.msra.mxu0 %v241
    %261 = vmatprep.subr.bf16.mxu0 0
    %262 = vmatpush1.bf16.msra.mxu0 %v240
    %263 = vmatprep.subr.bf16.mxu0 0
    %264 = vmatpush1.bf16.msra.mxu0 %v239
    %265 = vmatprep.subr.bf16.mxu0 0
    %266 = vmatpush1.bf16.msra.mxu0 %v238
    %267 = vmatprep.subr.bf16.mxu0 0
    %268 = vmatpush1.bf16.msra.mxu0 %v237
    %269 = vmatprep.subr.bf16.mxu0 0
    %270 = vmatpush2.bf16.msra.mxu0 0
    %271 = vmatprep.subr.bf16.mxu0 0
    %272 = vmatpush2.bf16.msra.mxu0 0
    %273 = vmatprep.subr.bf16.mxu0 0
    %274 = vmatpush2.bf16.msra.mxu0 0
    %275 = vmatprep.subr.bf16.mxu0 0
    %276 = vmatpush2.bf16.msra.mxu0 0
    %277 = vmatprep.subr.bf16.mxu0 0
    %278 = vmatpush2.bf16.msra.mxu0 0
    %279 = vmatprep.subr.bf16.mxu0 0
    %280 = vmatpush2.bf16.msra.mxu0 0
    %281 = vmatprep.subr.bf16.mxu0 0
    %282 = vmatpush2.bf16.msra.mxu0 0
    %283 = vmatprep.subr.bf16.mxu0 0
    %284 = vmatpush2.bf16.msra.mxu0 0
    %285 = vmatprep.mubr.bf16.mxu0 0
    %286 = vmatmul.mubr.bf16.gmra.mxu0 %v173
    %v287 = vpop.f32.mrf.mxu0
    %v288 = vadd.f32 0.0, %v287
    %v289 = vpop.f32.mrf.mxu0
    %v290 = vpop.f32.mrf.mxu0
    %v291 = vadd.f32 0.0, %v290
    %v292 = vpop.f32.mrf.mxu0
    %293 = vmatprep.mubr.bf16.mxu0 0
    %294 = vmatmul.mubr.bf16.gmra.mxu0 %v174
    %v295 = vpop.f32.mrf.mxu0
    %v296 = vadd.f32 0.0, %v295
    %v297 = vpop.f32.mrf.mxu0
    %v298 = vpop.f32.mrf.mxu0
    %v299 = vadd.f32 0.0, %v298
    %v300 = vpop.f32.mrf.mxu0
    %301 = vmatprep.mubr.bf16.mxu0 0
    %302 = vmatmul.mubr.bf16.gmra.mxu0 %v175
    %v303 = vpop.f32.mrf.mxu0
    %v304 = vadd.f32 0.0, %v303
    %v305 = vpop.f32.mrf.mxu0
    %v306 = vpop.f32.mrf.mxu0
    %v307 = vadd.f32 0.0, %v306
    %v308 = vpop.f32.mrf.mxu0
    %309 = vmatprep.mubr.bf16.mxu0 0
    %310 = vmatmul.mubr.bf16.gmra.mxu0 %v176
    %v311 = vpop.f32.mrf.mxu0
    %v312 = vadd.f32 0.0, %v311
    %v313 = vpop.f32.mrf.mxu0
    %v314 = vpop.f32.mrf.mxu0
    %v315 = vadd.f32 0.0, %v314
    %v316 = vpop.f32.mrf.mxu0
    %317 = vmatprep.mubr.bf16.mxu0 0
    %318 = vmatmul.mubr.bf16.gmra.mxu0 %v177
    %v319 = vpop.f32.mrf.mxu0
    %v320 = vadd.f32 0.0, %v319
    %v321 = vpop.f32.mrf.mxu0
    %v322 = vpop.f32.mrf.mxu0
    %v323 = vadd.f32 0.0, %v322
    %v324 = vpop.f32.mrf.mxu0
    %325 = vmatprep.mubr.bf16.mxu0 0
    %326 = vmatmul.mubr.bf16.gmra.mxu0 %v178
    %v327 = vpop.f32.mrf.mxu0
    %v328 = vadd.f32 0.0, %v327
    %v329 = vpop.f32.mrf.mxu0
    %v330 = vpop.f32.mrf.mxu0
    %v331 = vadd.f32 0.0, %v330
    %v332 = vpop.f32.mrf.mxu0
    %333 = vmatprep.mubr.bf16.mxu0 0
    %334 = vmatmul.mubr.bf16.gmra.mxu0 %v179
    %v335 = vpop.f32.mrf.mxu0
    %v336 = vadd.f32 0.0, %v335
    %v337 = vpop.f32.mrf.mxu0
    %v338 = vpop.f32.mrf.mxu0
    %v339 = vadd.f32 0.0, %v338
    %v340 = vpop.f32.mrf.mxu0
    %341 = vmatprep.mubr.bf16.mxu0 0
    %342 = vmatmul.mubr.bf16.gmra.mxu0 %v180
    %v343 = vpop.f32.mrf.mxu0
    %v344 = vadd.f32 0.0, %v343
    %v345 = vpop.f32.mrf.mxu0
    %v346 = vpop.f32.mrf.mxu0
    %v347 = vadd.f32 0.0, %v346
    %v348 = vpop.f32.mrf.mxu0
    %349 = vmatprep.mubr.bf16.mxu0 0
    %350 = vmatmul.mubr.bf16.gmra.mxu0 %v181
    %v351 = vpop.f32.mrf.mxu0
    %v352 = vadd.f32 0.0, %v351
    %v353 = vpop.f32.mrf.mxu0
    %v354 = vpop.f32.mrf.mxu0
    %v355 = vadd.f32 0.0, %v354
    %v356 = vpop.f32.mrf.mxu0
    %357 = vmatprep.mubr.bf16.mxu0 0
    %358 = vmatmul.mubr.bf16.gmra.mxu0 %v182
    %v359 = vpop.f32.mrf.mxu0
    %v360 = vadd.f32 0.0, %v359
    %v361 = vpop.f32.mrf.mxu0
    %v362 = vpop.f32.mrf.mxu0
    %v363 = vadd.f32 0.0, %v362
    %v364 = vpop.f32.mrf.mxu0
    %365 = vmatprep.mubr.bf16.mxu0 0
    %366 = vmatmul.mubr.bf16.gmra.mxu0 %v183
    %v367 = vpop.f32.mrf.mxu0
    %v368 = vadd.f32 0.0, %v367
    %v369 = vpop.f32.mrf.mxu0
    %v370 = vpop.f32.mrf.mxu0
    %v371 = vadd.f32 0.0, %v370
    %v372 = vpop.f32.mrf.mxu0
    %373 = vmatprep.mubr.bf16.mxu0 0
    %374 = vmatmul.mubr.bf16.gmra.mxu0 %v184
    %v375 = vpop.f32.mrf.mxu0
    %v376 = vadd.f32 0.0, %v375
    %v377 = vpop.f32.mrf.mxu0
    %v378 = vpop.f32.mrf.mxu0
    %v379 = vadd.f32 0.0, %v378
    %v380 = vpop.f32.mrf.mxu0
    %381 = vmatprep.mubr.bf16.mxu0 0
    %382 = vmatmul.mubr.bf16.gmra.mxu0 %v185
    %v383 = vpop.f32.mrf.mxu0
    %v384 = vadd.f32 0.0, %v383
    %v385 = vpop.f32.mrf.mxu0
    %v386 = vpop.f32.mrf.mxu0
    %v387 = vadd.f32 0.0, %v386
    %v388 = vpop.f32.mrf.mxu0
    %389 = vmatprep.mubr.bf16.mxu0 0
    %390 = vmatmul.mubr.bf16.gmra.mxu0 %v186
    %v391 = vpop.f32.mrf.mxu0
    %v392 = vadd.f32 0.0, %v391
    %v393 = vpop.f32.mrf.mxu0
    %v394 = vpop.f32.mrf.mxu0
    %v395 = vadd.f32 0.0, %v394
    %v396 = vpop.f32.mrf.mxu0
    %397 = vmatprep.mubr.bf16.mxu0 0
    %398 = vmatmul.mubr.bf16.gmra.mxu0 %v187
    %v399 = vpop.f32.mrf.mxu0
    %v400 = vadd.f32 0.0, %v399
    %v401 = vpop.f32.mrf.mxu0
    %v402 = vpop.f32.mrf.mxu0
    %v403 = vadd.f32 0.0, %v402
    %v404 = vpop.f32.mrf.mxu0
    %405 = vmatprep.mubr.bf16.mxu0 0
    %406 = vmatmul.mubr.bf16.gmra.mxu0 %v188
    %v407 = vpop.f32.mrf.mxu0
    %v408 = vadd.f32 0.0, %v407
    %v409 = vpop.f32.mrf.mxu0
    %v410 = vpop.f32.mrf.mxu0
    %v411 = vadd.f32 0.0, %v410
    %v412 = vpop.f32.mrf.mxu0
    %413 = vdwg.mxu0
    %v414 = vpack.c.bf16 %v291, %v288
    %v415 = vpack.c.bf16 %v299, %v296
    %v416 = vpack.c.bf16 %v307, %v304
    %v417 = vpack.c.bf16 %v315, %v312
    %v418 = vpack.c.bf16 %v323, %v320
    %v419 = vpack.c.bf16 %v331, %v328
    %v420 = vpack.c.bf16 %v339, %v336
    %v421 = vpack.c.bf16 %v347, %v344
    %v422 = vpack.c.bf16 %v355, %v352
    %v423 = vpack.c.bf16 %v363, %v360
    %v424 = vpack.c.bf16 %v371, %v368
    %v425 = vpack.c.bf16 %v379, %v376
    %v426 = vpack.c.bf16 %v387, %v384
    %v427 = vpack.c.bf16 %v395, %v392
    %v428 = vpack.c.bf16 %v403, %v400
    %v429 = vpack.c.bf16 %v411, %v408
    %v430 = vld [vmem:[#allocation7] sm:$0xff]
    %v431 = vld [vmem:[#allocation7 + $0x8] sm:$0xf]
    %v432 = vld [vmem:[#allocation7 + $0xc] sm:$0xff]
    %v433 = vld [vmem:[#allocation7 + $0x14] sm:$0xf]
    %v434 = vld [vmem:[#allocation7 + $0x18] sm:$0xff]
    %v435 = vld [vmem:[#allocation7 + $0x20] sm:$0xf]
    %v436 = vld [vmem:[#allocation7 + $0x24] sm:$0xff]
    %v437 = vld [vmem:[#allocation7 + $0x2c] sm:$0xf]
    %v438 = vld [vmem:[#allocation7 + $0x30] sm:$0xff]
    %v439 = vld [vmem:[#allocation7 + $0x38] sm:$0xf]
    %v440 = vld [vmem:[#allocation7 + $0x3c] sm:$0xff]
    %v441 = vld [vmem:[#allocation7 + $0x44] sm:$0xf]
    %v442 = vld [vmem:[#allocation7 + $0x48] sm:$0xff]
    %v443 = vld [vmem:[#allocation7 + $0x50] sm:$0xf]
    %v444 = vld [vmem:[#allocation7 + $0x54] sm:$0xff]
    %v445 = vld [vmem:[#allocation7 + $0x5c] sm:$0xf]
    %v446 = vld [vmem:[#allocation7 + $0x60] sm:$0xff]
    %v447 = vld [vmem:[#allocation7 + $0x68] sm:$0xf]
    %v448 = vld [vmem:[#allocation7 + $0x6c] sm:$0xff]
    %v449 = vld [vmem:[#allocation7 + $0x74] sm:$0xf]
    %v450 = vld [vmem:[#allocation7 + $0x78] sm:$0xff]
    %v451 = vld [vmem:[#allocation7 + $0x80] sm:$0xf]
    %v452 = vld [vmem:[#allocation7 + $0x84] sm:$0xff]
    %v453 = vld [vmem:[#allocation7 + $0x8c] sm:$0xf]
    %v454 = vld [vmem:[#allocation7 + $0x90] sm:$0xff]
    %v455 = vld [vmem:[#allocation7 + $0x98] sm:$0xf]
    %v456 = vld [vmem:[#allocation7 + $0x9c] sm:$0xff]
    %v457 = vld [vmem:[#allocation7 + $0xa4] sm:$0xf]
    %v458 = vld [vmem:[#allocation7 + $0xa8] sm:$0xff]
    %v459 = vld [vmem:[#allocation7 + $0xb0] sm:$0xf]
    %v460 = vld [vmem:[#allocation7 + $0xb4] sm:$0xff]
    %v461 = vld [vmem:[#allocation7 + $0xbc] sm:$0xf]
    %v494 = vunpack.c.l.b16 %v430
    %v495 = vunpack.c.h.b16 %v430
    %v496 = vunpack.c.l.b16 %v431
    %v497 = vunpack.c.l.b16 %v432
    %v498 = vunpack.c.h.b16 %v432
    %v499 = vunpack.c.l.b16 %v433
    %v500 = vunpack.c.l.b16 %v434
    %v501 = vunpack.c.h.b16 %v434
    %v502 = vunpack.c.l.b16 %v435
    %v503 = vunpack.c.l.b16 %v436
    %v504 = vunpack.c.h.b16 %v436
    %v505 = vunpack.c.l.b16 %v437
    %v506 = vunpack.c.l.b16 %v438
    %v507 = vunpack.c.h.b16 %v438
    %v508 = vunpack.c.l.b16 %v439
    %v509 = vunpack.c.l.b16 %v440
    %v510 = vunpack.c.h.b16 %v440
    %v511 = vunpack.c.l.b16 %v441
    %v512 = vunpack.c.l.b16 %v442
    %v513 = vunpack.c.h.b16 %v442
    %v514 = vunpack.c.l.b16 %v443
    %v515 = vunpack.c.l.b16 %v444
    %v516 = vunpack.c.h.b16 %v444
    %v517 = vunpack.c.l.b16 %v445
    %v518 = vunpack.c.l.b16 %v446
    %v519 = vunpack.c.h.b16 %v446
    %v520 = vunpack.c.l.b16 %v447
    %v521 = vunpack.c.l.b16 %v448
    %v522 = vunpack.c.h.b16 %v448
    %v523 = vunpack.c.l.b16 %v449
    %v524 = vunpack.c.l.b16 %v450
    %v525 = vunpack.c.h.b16 %v450
    %v526 = vunpack.c.l.b16 %v451
    %v527 = vunpack.c.l.b16 %v452
    %v528 = vunpack.c.h.b16 %v452
    %v529 = vunpack.c.l.b16 %v453
    %v530 = vunpack.c.l.b16 %v454
    %v531 = vunpack.c.h.b16 %v454
    %v532 = vunpack.c.l.b16 %v455
    %v533 = vunpack.c.l.b16 %v456
    %v534 = vunpack.c.h.b16 %v456
    %v535 = vunpack.c.l.b16 %v457
    %v536 = vunpack.c.l.b16 %v458
    %v537 = vunpack.c.h.b16 %v458
    %v538 = vunpack.c.l.b16 %v459
    %v539 = vunpack.c.l.b16 %v460
    %v540 = vunpack.c.h.b16 %v460
    %v541 = vunpack.c.l.b16 %v461
    %v542 = vpack.c.b16 %v497, %v494
    %v543 = vpack.c.b16 %v498, %v495
    %v544 = vpack.c.b16 %v499, %v496
    %v545 = vpack.c.b16 %v503, %v500
    %v546 = vpack.c.b16 %v504, %v501
    %v547 = vpack.c.b16 %v505, %v502
    %v548 = vpack.c.b16 %v509, %v506
    %v549 = vpack.c.b16 %v510, %v507
    %v550 = vpack.c.b16 %v511, %v508
    %v551 = vpack.c.b16 %v515, %v512
    %v552 = vpack.c.b16 %v516, %v513
    %v553 = vpack.c.b16 %v517, %v514
    %v554 = vpack.c.b16 %v521, %v518
    %v555 = vpack.c.b16 %v522, %v519
    %v556 = vpack.c.b16 %v523, %v520
    %v557 = vpack.c.b16 %v527, %v524
    %v558 = vpack.c.b16 %v528, %v525
    %v559 = vpack.c.b16 %v529, %v526
    %v560 = vpack.c.b16 %v533, %v530
    %v561 = vpack.c.b16 %v534, %v531
    %v562 = vpack.c.b16 %v535, %v532
    %v563 = vpack.c.b16 %v539, %v536
    %v564 = vpack.c.b16 %v540, %v537
    %v565 = vpack.c.b16 %v541, %v538
    %590 = vmatprep.subr.bf16.mxu0 %v564
    %591 = vmatpush1.bf16.msra.mxu0 %v563
    %592 = vmatprep.subr.bf16.mxu0 %v561
    %593 = vmatpush1.bf16.msra.mxu0 %v560
    %594 = vmatprep.subr.bf16.mxu0 %v558
    %595 = vmatpush1.bf16.msra.mxu0 %v557
    %596 = vmatprep.subr.bf16.mxu0 %v555
    %597 = vmatpush1.bf16.msra.mxu0 %v554
    %598 = vmatprep.subr.bf16.mxu0 %v552
    %599 = vmatpush1.bf16.msra.mxu0 %v551
    %600 = vmatprep.subr.bf16.mxu0 %v549
    %601 = vmatpush1.bf16.msra.mxu0 %v548
    %602 = vmatprep.subr.bf16.mxu0 %v546
    %603 = vmatpush1.bf16.msra.mxu0 %v545
    %604 = vmatprep.subr.bf16.mxu0 %v543
    %605 = vmatpush1.bf16.msra.mxu0 %v542
    %606 = vmatprep.subr.bf16.mxu0 0
    %607 = vmatpush2.bf16.msra.mxu0 0
    %608 = vmatprep.subr.bf16.mxu0 0
    %609 = vmatpush2.bf16.msra.mxu0 0
    %610 = vmatprep.subr.bf16.mxu0 0
    %611 = vmatpush2.bf16.msra.mxu0 0
    %612 = vmatprep.subr.bf16.mxu0 0
    %613 = vmatpush2.bf16.msra.mxu0 0
    %614 = vmatprep.subr.bf16.mxu0 0
    %615 = vmatpush2.bf16.msra.mxu0 0
    %616 = vmatprep.subr.bf16.mxu0 0
    %617 = vmatpush2.bf16.msra.mxu0 0
    %618 = vmatprep.subr.bf16.mxu0 0
    %619 = vmatpush2.bf16.msra.mxu0 0
    %620 = vmatprep.subr.bf16.mxu0 0
    %621 = vmatpush2.bf16.msra.mxu0 0
    %622 = vmatprep.mubr.bf16.mxu0 0
    %623 = vmatmul.mubr.bf16.gmra.mxu0 %v414
    %v624 = vpop.f32.mrf.mxu0
    %v625 = vadd.f32 0.0, %v624
    %v626 = vpop.f32.mrf.mxu0
    %v627 = vadd.f32 0.0, %v626
    %v628 = vpop.f32.mrf.mxu0
    %v629 = vadd.f32 0.0, %v628
    %v630 = vpop.f32.mrf.mxu0
    %v631 = vadd.f32 0.0, %v630
    %632 = vmatprep.mubr.bf16.mxu0 0
    %633 = vmatmul.mubr.bf16.gmra.mxu0 %v415
    %v634 = vpop.f32.mrf.mxu0
    %v635 = vadd.f32 0.0, %v634
    %v636 = vpop.f32.mrf.mxu0
    %v637 = vadd.f32 0.0, %v636
    %v638 = vpop.f32.mrf.mxu0
    %v639 = vadd.f32 0.0, %v638
    %v640 = vpop.f32.mrf.mxu0
    %v641 = vadd.f32 0.0, %v640
    %642 = vmatprep.mubr.bf16.mxu0 0
    %643 = vmatmul.mubr.bf16.gmra.mxu0 %v416
    %v644 = vpop.f32.mrf.mxu0
    %v645 = vadd.f32 0.0, %v644
    %v646 = vpop.f32.mrf.mxu0
    %v647 = vadd.f32 0.0, %v646
    %v648 = vpop.f32.mrf.mxu0
    %v649 = vadd.f32 0.0, %v648
    %v650 = vpop.f32.mrf.mxu0
    %v651 = vadd.f32 0.0, %v650
    %652 = vmatprep.mubr.bf16.mxu0 0
    %653 = vmatmul.mubr.bf16.gmra.mxu0 %v417
    %v654 = vpop.f32.mrf.mxu0
    %v655 = vadd.f32 0.0, %v654
    %v656 = vpop.f32.mrf.mxu0
    %v657 = vadd.f32 0.0, %v656
    %v658 = vpop.f32.mrf.mxu0
    %v659 = vadd.f32 0.0, %v658
    %v660 = vpop.f32.mrf.mxu0
    %v661 = vadd.f32 0.0, %v660
    %662 = vmatprep.mubr.bf16.mxu0 0
    %663 = vmatmul.mubr.bf16.gmra.mxu0 %v418
    %v664 = vpop.f32.mrf.mxu0
    %v665 = vadd.f32 0.0, %v664
    %v666 = vpop.f32.mrf.mxu0
    %v667 = vadd.f32 0.0, %v666
    %v668 = vpop.f32.mrf.mxu0
    %v669 = vadd.f32 0.0, %v668
    %v670 = vpop.f32.mrf.mxu0
    %v671 = vadd.f32 0.0, %v670
    %672 = vmatprep.mubr.bf16.mxu0 0
    %673 = vmatmul.mubr.bf16.gmra.mxu0 %v419
    %v674 = vpop.f32.mrf.mxu0
    %v675 = vadd.f32 0.0, %v674
    %v676 = vpop.f32.mrf.mxu0
    %v677 = vadd.f32 0.0, %v676
    %v678 = vpop.f32.mrf.mxu0
    %v679 = vadd.f32 0.0, %v678
    %v680 = vpop.f32.mrf.mxu0
    %v681 = vadd.f32 0.0, %v680
    %682 = vmatprep.mubr.bf16.mxu0 0
    %683 = vmatmul.mubr.bf16.gmra.mxu0 %v420
    %v684 = vpop.f32.mrf.mxu0
    %v685 = vadd.f32 0.0, %v684
    %v686 = vpop.f32.mrf.mxu0
    %v687 = vadd.f32 0.0, %v686
    %v688 = vpop.f32.mrf.mxu0
    %v689 = vadd.f32 0.0, %v688
    %v690 = vpop.f32.mrf.mxu0
    %v691 = vadd.f32 0.0, %v690
    %692 = vmatprep.mubr.bf16.mxu0 0
    %693 = vmatmul.mubr.bf16.gmra.mxu0 %v421
    %v694 = vpop.f32.mrf.mxu0
    %v695 = vadd.f32 0.0, %v694
    %v696 = vpop.f32.mrf.mxu0
    %v697 = vadd.f32 0.0, %v696
    %v698 = vpop.f32.mrf.mxu0
    %v699 = vadd.f32 0.0, %v698
    %v700 = vpop.f32.mrf.mxu0
    %v701 = vadd.f32 0.0, %v700
    %702 = vmatprep.mubr.bf16.mxu0 0
    %703 = vmatmul.mubr.bf16.gmra.mxu0 %v422
    %v704 = vpop.f32.mrf.mxu0
    %v705 = vadd.f32 0.0, %v704
    %v706 = vpop.f32.mrf.mxu0
    %v707 = vadd.f32 0.0, %v706
    %v708 = vpop.f32.mrf.mxu0
    %v709 = vadd.f32 0.0, %v708
    %v710 = vpop.f32.mrf.mxu0
    %v711 = vadd.f32 0.0, %v710
    %712 = vmatprep.mubr.bf16.mxu0 0
    %713 = vmatmul.mubr.bf16.gmra.mxu0 %v423
    %v714 = vpop.f32.mrf.mxu0
    %v715 = vadd.f32 0.0, %v714
    %v716 = vpop.f32.mrf.mxu0
    %v717 = vadd.f32 0.0, %v716
    %v718 = vpop.f32.mrf.mxu0
    %v719 = vadd.f32 0.0, %v718
    %v720 = vpop.f32.mrf.mxu0
    %v721 = vadd.f32 0.0, %v720
    %722 = vmatprep.mubr.bf16.mxu0 0
    %723 = vmatmul.mubr.bf16.gmra.mxu0 %v424
    %v724 = vpop.f32.mrf.mxu0
    %v725 = vadd.f32 0.0, %v724
    %v726 = vpop.f32.mrf.mxu0
    %v727 = vadd.f32 0.0, %v726
    %v728 = vpop.f32.mrf.mxu0
    %v729 = vadd.f32 0.0, %v728
    %v730 = vpop.f32.mrf.mxu0
    %v731 = vadd.f32 0.0, %v730
    %732 = vmatprep.mubr.bf16.mxu0 0
    %733 = vmatmul.mubr.bf16.gmra.mxu0 %v425
    %v734 = vpop.f32.mrf.mxu0
    %v735 = vadd.f32 0.0, %v734
    %v736 = vpop.f32.mrf.mxu0
    %v737 = vadd.f32 0.0, %v736
    %v738 = vpop.f32.mrf.mxu0
    %v739 = vadd.f32 0.0, %v738
    %v740 = vpop.f32.mrf.mxu0
    %v741 = vadd.f32 0.0, %v740
    %742 = vmatprep.mubr.bf16.mxu0 0
    %743 = vmatmul.mubr.bf16.gmra.mxu0 %v426
    %v744 = vpop.f32.mrf.mxu0
    %v745 = vadd.f32 0.0, %v744
    %v746 = vpop.f32.mrf.mxu0
    %v747 = vadd.f32 0.0, %v746
    %v748 = vpop.f32.mrf.mxu0
    %v749 = vadd.f32 0.0, %v748
    %v750 = vpop.f32.mrf.mxu0
    %v751 = vadd.f32 0.0, %v750
    %752 = vmatprep.mubr.bf16.mxu0 0
    %753 = vmatmul.mubr.bf16.gmra.mxu0 %v427
    %v754 = vpop.f32.mrf.mxu0
    %v755 = vadd.f32 0.0, %v754
    %v756 = vpop.f32.mrf.mxu0
    %v757 = vadd.f32 0.0, %v756
    %v758 = vpop.f32.mrf.mxu0
    %v759 = vadd.f32 0.0, %v758
    %v760 = vpop.f32.mrf.mxu0
    %v761 = vadd.f32 0.0, %v760
    %762 = vmatprep.mubr.bf16.mxu0 0
    %763 = vmatmul.mubr.bf16.gmra.mxu0 %v428
    %v764 = vpop.f32.mrf.mxu0
    %v765 = vadd.f32 0.0, %v764
    %v766 = vpop.f32.mrf.mxu0
    %v767 = vadd.f32 0.0, %v766
    %v768 = vpop.f32.mrf.mxu0
    %v769 = vadd.f32 0.0, %v768
    %v770 = vpop.f32.mrf.mxu0
    %v771 = vadd.f32 0.0, %v770
    %772 = vmatprep.mubr.bf16.mxu0 0
    %773 = vmatmul.mubr.bf16.gmra.mxu0 %v429
    %v774 = vpop.f32.mrf.mxu0
    %v775 = vadd.f32 0.0, %v774
    %v776 = vpop.f32.mrf.mxu0
    %v777 = vadd.f32 0.0, %v776
    %v778 = vpop.f32.mrf.mxu0
    %v779 = vadd.f32 0.0, %v778
    %v780 = vpop.f32.mrf.mxu0
    %v781 = vadd.f32 0.0, %v780
    %782 = vdwg.mxu0
    %783 = vmatprep.subr.bf16.mxu0 0
    %784 = vmatpush1.bf16.msra.mxu0 %v565
    %785 = vmatprep.subr.bf16.mxu0 0
    %786 = vmatpush1.bf16.msra.mxu0 %v562
    %787 = vmatprep.subr.bf16.mxu0 0
    %788 = vmatpush1.bf16.msra.mxu0 %v559
    %789 = vmatprep.subr.bf16.mxu0 0
    %790 = vmatpush1.bf16.msra.mxu0 %v556
    %791 = vmatprep.subr.bf16.mxu0 0
    %792 = vmatpush1.bf16.msra.mxu0 %v553
    %793 = vmatprep.subr.bf16.mxu0 0
    %794 = vmatpush1.bf16.msra.mxu0 %v550
    %795 = vmatprep.subr.bf16.mxu0 0
    %796 = vmatpush1.bf16.msra.mxu0 %v547
    %797 = vmatprep.subr.bf16.mxu0 0
    %798 = vmatpush1.bf16.msra.mxu0 %v544
    %799 = vmatprep.subr.bf16.mxu0 0
    %800 = vmatpush2.bf16.msra.mxu0 0
    %801 = vmatprep.subr.bf16.mxu0 0
    %802 = vmatpush2.bf16.msra.mxu0 0
    %803 = vmatprep.subr.bf16.mxu0 0
    %804 = vmatpush2.bf16.msra.mxu0 0
    %805 = vmatprep.subr.bf16.mxu0 0
    %806 = vmatpush2.bf16.msra.mxu0 0
    %807 = vmatprep.subr.bf16.mxu0 0
    %808 = vmatpush2.bf16.msra.mxu0 0
    %809 = vmatprep.subr.bf16.mxu0 0
    %810 = vmatpush2.bf16.msra.mxu0 0
    %811 = vmatprep.subr.bf16.mxu0 0
    %812 = vmatpush2.bf16.msra.mxu0 0
    %813 = vmatprep.subr.bf16.mxu0 0
    %814 = vmatpush2.bf16.msra.mxu0 0
    %815 = vmatprep.mubr.bf16.mxu0 0
    %816 = vmatmul.mubr.bf16.gmra.mxu0 %v414
    %v817 = vpop.f32.mrf.mxu0
    %v818 = vadd.f32 0.0, %v817
    %v819 = vpop.f32.mrf.mxu0
    %v820 = vpop.f32.mrf.mxu0
    %v821 = vadd.f32 0.0, %v820
    %v822 = vpop.f32.mrf.mxu0
    %823 = vmatprep.mubr.bf16.mxu0 0
    %824 = vmatmul.mubr.bf16.gmra.mxu0 %v415
    %v825 = vpop.f32.mrf.mxu0
    %v826 = vadd.f32 0.0, %v825
    %v827 = vpop.f32.mrf.mxu0
    %v828 = vpop.f32.mrf.mxu0
    %v829 = vadd.f32 0.0, %v828
    %v830 = vpop.f32.mrf.mxu0
    %831 = vmatprep.mubr.bf16.mxu0 0
    %832 = vmatmul.mubr.bf16.gmra.mxu0 %v416
    %v833 = vpop.f32.mrf.mxu0
    %v834 = vadd.f32 0.0, %v833
    %v835 = vpop.f32.mrf.mxu0
    %v836 = vpop.f32.mrf.mxu0
    %v837 = vadd.f32 0.0, %v836
    %v838 = vpop.f32.mrf.mxu0
    %839 = vmatprep.mubr.bf16.mxu0 0
    %840 = vmatmul.mubr.bf16.gmra.mxu0 %v417
    %v841 = vpop.f32.mrf.mxu0
    %v842 = vadd.f32 0.0, %v841
    %v843 = vpop.f32.mrf.mxu0
    %v844 = vpop.f32.mrf.mxu0
    %v845 = vadd.f32 0.0, %v844
    %v846 = vpop.f32.mrf.mxu0
    %847 = vmatprep.mubr.bf16.mxu0 0
    %848 = vmatmul.mubr.bf16.gmra.mxu0 %v418
    %v849 = vpop.f32.mrf.mxu0
    %v850 = vadd.f32 0.0, %v849
    %v851 = vpop.f32.mrf.mxu0
    %v852 = vpop.f32.mrf.mxu0
    %v853 = vadd.f32 0.0, %v852
    %v854 = vpop.f32.mrf.mxu0
    %855 = vmatprep.mubr.bf16.mxu0 0
    %856 = vmatmul.mubr.bf16.gmra.mxu0 %v419
    %v857 = vpop.f32.mrf.mxu0
    %v858 = vadd.f32 0.0, %v857
    %v859 = vpop.f32.mrf.mxu0
    %v860 = vpop.f32.mrf.mxu0
    %v861 = vadd.f32 0.0, %v860
    %v862 = vpop.f32.mrf.mxu0
    %863 = vmatprep.mubr.bf16.mxu0 0
    %864 = vmatmul.mubr.bf16.gmra.mxu0 %v420
    %v865 = vpop.f32.mrf.mxu0
    %v866 = vadd.f32 0.0, %v865
    %v867 = vpop.f32.mrf.mxu0
    %v868 = vpop.f32.mrf.mxu0
    %v869 = vadd.f32 0.0, %v868
    %v870 = vpop.f32.mrf.mxu0
    %871 = vmatprep.mubr.bf16.mxu0 0
    %872 = vmatmul.mubr.bf16.gmra.mxu0 %v421
    %v873 = vpop.f32.mrf.mxu0
    %v874 = vadd.f32 0.0, %v873
    %v875 = vpop.f32.mrf.mxu0
    %v876 = vpop.f32.mrf.mxu0
    %v877 = vadd.f32 0.0, %v876
    %v878 = vpop.f32.mrf.mxu0
    %879 = vmatprep.mubr.bf16.mxu0 0
    %880 = vmatmul.mubr.bf16.gmra.mxu0 %v422
    %v881 = vpop.f32.mrf.mxu0
    %v882 = vadd.f32 0.0, %v881
    %v883 = vpop.f32.mrf.mxu0
    %v884 = vpop.f32.mrf.mxu0
    %v885 = vadd.f32 0.0, %v884
    %v886 = vpop.f32.mrf.mxu0
    %887 = vmatprep.mubr.bf16.mxu0 0
    %888 = vmatmul.mubr.bf16.gmra.mxu0 %v423
    %v889 = vpop.f32.mrf.mxu0
    %v890 = vadd.f32 0.0, %v889
    %v891 = vpop.f32.mrf.mxu0
    %v892 = vpop.f32.mrf.mxu0
    %v893 = vadd.f32 0.0, %v892
    %v894 = vpop.f32.mrf.mxu0
    %895 = vmatprep.mubr.bf16.mxu0 0
    %896 = vmatmul.mubr.bf16.gmra.mxu0 %v424
    %v897 = vpop.f32.mrf.mxu0
    %v898 = vadd.f32 0.0, %v897
    %v899 = vpop.f32.mrf.mxu0
    %v900 = vpop.f32.mrf.mxu0
    %v901 = vadd.f32 0.0, %v900
    %v902 = vpop.f32.mrf.mxu0
    %903 = vmatprep.mubr.bf16.mxu0 0
    %904 = vmatmul.mubr.bf16.gmra.mxu0 %v425
    %v905 = vpop.f32.mrf.mxu0
    %v906 = vadd.f32 0.0, %v905
    %v907 = vpop.f32.mrf.mxu0
    %v908 = vpop.f32.mrf.mxu0
    %v909 = vadd.f32 0.0, %v908
    %v910 = vpop.f32.mrf.mxu0
    %911 = vmatprep.mubr.bf16.mxu0 0
    %912 = vmatmul.mubr.bf16.gmra.mxu0 %v426
    %v913 = vpop.f32.mrf.mxu0
    %v914 = vadd.f32 0.0, %v913
    %v915 = vpop.f32.mrf.mxu0
    %v916 = vpop.f32.mrf.mxu0
    %v917 = vadd.f32 0.0, %v916
    %v918 = vpop.f32.mrf.mxu0
    %919 = vmatprep.mubr.bf16.mxu0 0
    %920 = vmatmul.mubr.bf16.gmra.mxu0 %v427
    %v921 = vpop.f32.mrf.mxu0
    %v922 = vadd.f32 0.0, %v921
    %v923 = vpop.f32.mrf.mxu0
    %v924 = vpop.f32.mrf.mxu0
    %v925 = vadd.f32 0.0, %v924
    %v926 = vpop.f32.mrf.mxu0
    %927 = vmatprep.mubr.bf16.mxu0 0
    %928 = vmatmul.mubr.bf16.gmra.mxu0 %v428
    %v929 = vpop.f32.mrf.mxu0
    %v930 = vadd.f32 0.0, %v929
    %v931 = vpop.f32.mrf.mxu0
    %v932 = vpop.f32.mrf.mxu0
    %v933 = vadd.f32 0.0, %v932
    %v934 = vpop.f32.mrf.mxu0
    %935 = vmatprep.mubr.bf16.mxu0 0
    %936 = vmatmul.mubr.bf16.gmra.mxu0 %v429
    %v937 = vpop.f32.mrf.mxu0
    %v938 = vadd.f32 0.0, %v937
    %v939 = vpop.f32.mrf.mxu0
    %v940 = vpop.f32.mrf.mxu0
    %v941 = vadd.f32 0.0, %v940
    %v942 = vpop.f32.mrf.mxu0
    %943 = vdwg.mxu0
    %v944 = vpack.c.bf16 %v629, %v625
    %v945 = vpack.c.bf16 %v639, %v635
    %v946 = vpack.c.bf16 %v649, %v645
    %v947 = vpack.c.bf16 %v659, %v655
    %v948 = vpack.c.bf16 %v669, %v665
    %v949 = vpack.c.bf16 %v679, %v675
    %v950 = vpack.c.bf16 %v689, %v685
    %v951 = vpack.c.bf16 %v699, %v695
    %v952 = vpack.c.bf16 %v709, %v705
    %v953 = vpack.c.bf16 %v719, %v715
    %v954 = vpack.c.bf16 %v729, %v725
    %v955 = vpack.c.bf16 %v739, %v735
    %v956 = vpack.c.bf16 %v749, %v745
    %v957 = vpack.c.bf16 %v759, %v755
    %v958 = vpack.c.bf16 %v769, %v765
    %v959 = vpack.c.bf16 %v779, %v775
    %v976 = vunpack.c.l.b16 %v944
    %v977 = vunpack.c.h.b16 %v944
    %v978 = vunpack.c.l.b16 %v945
    %v979 = vunpack.c.h.b16 %v945
    %v980 = vunpack.c.l.b16 %v946
    %v981 = vunpack.c.h.b16 %v946
    %v982 = vunpack.c.l.b16 %v947
    %v983 = vunpack.c.h.b16 %v947
    %v984 = vunpack.c.l.b16 %v948
    %v985 = vunpack.c.h.b16 %v948
    %v986 = vunpack.c.l.b16 %v949
    %v987 = vunpack.c.h.b16 %v949
    %v988 = vunpack.c.l.b16 %v950
    %v989 = vunpack.c.h.b16 %v950
    %v990 = vunpack.c.l.b16 %v951
    %v991 = vunpack.c.h.b16 %v951
    %v992 = vunpack.c.l.b16 %v952
    %v993 = vunpack.c.h.b16 %v952
    %v994 = vunpack.c.l.b16 %v953
    %v995 = vunpack.c.h.b16 %v953
    %v996 = vunpack.c.l.b16 %v954
    %v997 = vunpack.c.h.b16 %v954
    %v998 = vunpack.c.l.b16 %v955
    %v999 = vunpack.c.h.b16 %v955
    %v1000 = vunpack.c.l.b16 %v956
    %v1001 = vunpack.c.h.b16 %v956
    %v1002 = vunpack.c.l.b16 %v957
    %v1003 = vunpack.c.h.b16 %v957
    %v1004 = vunpack.c.l.b16 %v958
    %v1005 = vunpack.c.h.b16 %v958
    %v1006 = vunpack.c.l.b16 %v959
    %v1007 = vunpack.c.h.b16 %v959
    %v1008 = vpack.c.b16 %v976, %v976
    %v1009 = vpack.c.b16 %v977, %v977
    %v1010 = vpack.c.b16 %v978, %v978
    %v1011 = vpack.c.b16 %v979, %v979
    %v1012 = vpack.c.b16 %v980, %v980
    %v1013 = vpack.c.b16 %v981, %v981
    %v1014 = vpack.c.b16 %v982, %v982
    %v1015 = vpack.c.b16 %v983, %v983
    %v1016 = vpack.c.b16 %v984, %v984
    %v1017 = vpack.c.b16 %v985, %v985
    %v1018 = vpack.c.b16 %v986, %v986
    %v1019 = vpack.c.b16 %v987, %v987
    %v1020 = vpack.c.b16 %v988, %v988
    %v1021 = vpack.c.b16 %v989, %v989
    %v1022 = vpack.c.b16 %v990, %v990
    %v1023 = vpack.c.b16 %v991, %v991
    %v1024 = vpack.c.b16 %v992, %v992
    %v1025 = vpack.c.b16 %v993, %v993
    %v1026 = vpack.c.b16 %v994, %v994
    %v1027 = vpack.c.b16 %v995, %v995
    %v1028 = vpack.c.b16 %v996, %v996
    %v1029 = vpack.c.b16 %v997, %v997
    %v1030 = vpack.c.b16 %v998, %v998
    %v1031 = vpack.c.b16 %v999, %v999
    %v1032 = vpack.c.b16 %v1000, %v1000
    %v1033 = vpack.c.b16 %v1001, %v1001
    %v1034 = vpack.c.b16 %v1002, %v1002
    %v1035 = vpack.c.b16 %v1003, %v1003
    %v1036 = vpack.c.b16 %v1004, %v1004
    %v1037 = vpack.c.b16 %v1005, %v1005
    %v1038 = vpack.c.b16 %v1006, %v1006
    %v1039 = vpack.c.b16 %v1007, %v1007
    %1072 = vst [vmem:[#allocation8] sm:$0xf] %v1008
    %1073 = vst [vmem:[#allocation8 + $0x4] sm:$0xf] %v1009
    %1074 = vst [vmem:[#allocation8 + $0x8] sm:$0xf] %v1010
    %1075 = vst [vmem:[#allocation8 + $0xc] sm:$0xf] %v1011
    %1076 = vst [vmem:[#allocation8 + $0x10] sm:$0xf] %v1012
    %1077 = vst [vmem:[#allocation8 + $0x14] sm:$0xf] %v1013
    %1078 = vst [vmem:[#allocation8 + $0x18] sm:$0xf] %v1014
    %1079 = vst [vmem:[#allocation8 + $0x1c] sm:$0xf] %v1015
    %1080 = vst [vmem:[#allocation8 + $0x20] sm:$0xf] %v1016
    %1081 = vst [vmem:[#allocation8 + $0x24] sm:$0xf] %v1017
    %1082 = vst [vmem:[#allocation8 + $0x28] sm:$0xf] %v1018
    %1083 = vst [vmem:[#allocation8 + $0x2c] sm:$0xf] %v1019
    %1084 = vst [vmem:[#allocation8 + $0x30] sm:$0xf] %v1020
    %1085 = vst [vmem:[#allocation8 + $0x34] sm:$0xf] %v1021
    %1086 = vst [vmem:[#allocation8 + $0x38] sm:$0xf] %v1022
    %1087 = vst [vmem:[#allocation8 + $0x3c] sm:$0xf] %v1023
    %1088 = vst [vmem:[#allocation8 + $0x40] sm:$0xf] %v1024
    %1089 = vst [vmem:[#allocation8 + $0x44] sm:$0xf] %v1025
    %1090 = vst [vmem:[#allocation8 + $0x48] sm:$0xf] %v1026
    %1091 = vst [vmem:[#allocation8 + $0x4c] sm:$0xf] %v1027
    %1092 = vst [vmem:[#allocation8 + $0x50] sm:$0xf] %v1028
    %1093 = vst [vmem:[#allocation8 + $0x54] sm:$0xf] %v1029
    %1094 = vst [vmem:[#allocation8 + $0x58] sm:$0xf] %v1030
    %1095 = vst [vmem:[#allocation8 + $0x5c] sm:$0xf] %v1031
    %1096 = vst [vmem:[#allocation8 + $0x60] sm:$0xf] %v1032
    %1097 = vst [vmem:[#allocation8 + $0x64] sm:$0xf] %v1033
    %1098 = vst [vmem:[#allocation8 + $0x68] sm:$0xf] %v1034
    %1099 = vst [vmem:[#allocation8 + $0x6c] sm:$0xf] %v1035
    %1100 = vst [vmem:[#allocation8 + $0x70] sm:$0xf] %v1036
    %1101 = vst [vmem:[#allocation8 + $0x74] sm:$0xf] %v1037
    %1102 = vst [vmem:[#allocation8 + $0x78] sm:$0xf] %v1038
    %1103 = vst [vmem:[#allocation8 + $0x7c] sm:$0xf] %v1039
    %v1104 = vpack.c.bf16 %v631, %v627
    %v1105 = vpack.c.bf16 %v641, %v637
    %v1106 = vpack.c.bf16 %v651, %v647
    %v1107 = vpack.c.bf16 %v661, %v657
    %v1108 = vpack.c.bf16 %v671, %v667
    %v1109 = vpack.c.bf16 %v681, %v677
    %v1110 = vpack.c.bf16 %v691, %v687
    %v1111 = vpack.c.bf16 %v701, %v697
    %v1112 = vpack.c.bf16 %v711, %v707
    %v1113 = vpack.c.bf16 %v721, %v717
    %v1114 = vpack.c.bf16 %v731, %v727
    %v1115 = vpack.c.bf16 %v741, %v737
    %v1116 = vpack.c.bf16 %v751, %v747
    %v1117 = vpack.c.bf16 %v761, %v757
    %v1118 = vpack.c.bf16 %v771, %v767
    %v1119 = vpack.c.bf16 %v781, %v777
    %v1136 = vunpack.c.l.b16 %v1104
    %v1137 = vunpack.c.h.b16 %v1104
    %v1138 = vunpack.c.l.b16 %v1105
    %v1139 = vunpack.c.h.b16 %v1105
    %v1140 = vunpack.c.l.b16 %v1106
    %v1141 = vunpack.c.h.b16 %v1106
    %v1142 = vunpack.c.l.b16 %v1107
    %v1143 = vunpack.c.h.b16 %v1107
    %v1144 = vunpack.c.l.b16 %v1108
    %v1145 = vunpack.c.h.b16 %v1108
    %v1146 = vunpack.c.l.b16 %v1109
    %v1147 = vunpack.c.h.b16 %v1109
    %v1148 = vunpack.c.l.b16 %v1110
    %v1149 = vunpack.c.h.b16 %v1110
    %v1150 = vunpack.c.l.b16 %v1111
    %v1151 = vunpack.c.h.b16 %v1111
    %v1152 = vunpack.c.l.b16 %v1112
    %v1153 = vunpack.c.h.b16 %v1112
    %v1154 = vunpack.c.l.b16 %v1113
    %v1155 = vunpack.c.h.b16 %v1113
    %v1156 = vunpack.c.l.b16 %v1114
    %v1157 = vunpack.c.h.b16 %v1114
    %v1158 = vunpack.c.l.b16 %v1115
    %v1159 = vunpack.c.h.b16 %v1115
    %v1160 = vunpack.c.l.b16 %v1116
    %v1161 = vunpack.c.h.b16 %v1116
    %v1162 = vunpack.c.l.b16 %v1117
    %v1163 = vunpack.c.h.b16 %v1117
    %v1164 = vunpack.c.l.b16 %v1118
    %v1165 = vunpack.c.h.b16 %v1118
    %v1166 = vunpack.c.l.b16 %v1119
    %v1167 = vunpack.c.h.b16 %v1119
    %v1168 = vpack.c.b16 %v1136, %v1136
    %v1169 = vpack.c.b16 %v1137, %v1137
    %v1170 = vpack.c.b16 %v1138, %v1138
    %v1171 = vpack.c.b16 %v1139, %v1139
    %v1172 = vpack.c.b16 %v1140, %v1140
    %v1173 = vpack.c.b16 %v1141, %v1141
    %v1174 = vpack.c.b16 %v1142, %v1142
    %v1175 = vpack.c.b16 %v1143, %v1143
    %v1176 = vpack.c.b16 %v1144, %v1144
    %v1177 = vpack.c.b16 %v1145, %v1145
    %v1178 = vpack.c.b16 %v1146, %v1146
    %v1179 = vpack.c.b16 %v1147, %v1147
    %v1180 = vpack.c.b16 %v1148, %v1148
    %v1181 = vpack.c.b16 %v1149, %v1149
    %v1182 = vpack.c.b16 %v1150, %v1150
    %v1183 = vpack.c.b16 %v1151, %v1151
    %v1184 = vpack.c.b16 %v1152, %v1152
    %v1185 = vpack.c.b16 %v1153, %v1153
    %v1186 = vpack.c.b16 %v1154, %v1154
    %v1187 = vpack.c.b16 %v1155, %v1155
    %v1188 = vpack.c.b16 %v1156, %v1156
    %v1189 = vpack.c.b16 %v1157, %v1157
    %v1190 = vpack.c.b16 %v1158, %v1158
    %v1191 = vpack.c.b16 %v1159, %v1159
    %v1192 = vpack.c.b16 %v1160, %v1160
    %v1193 = vpack.c.b16 %v1161, %v1161
    %v1194 = vpack.c.b16 %v1162, %v1162
    %v1195 = vpack.c.b16 %v1163, %v1163
    %v1196 = vpack.c.b16 %v1164, %v1164
    %v1197 = vpack.c.b16 %v1165, %v1165
    %v1198 = vpack.c.b16 %v1166, %v1166
    %v1199 = vpack.c.b16 %v1167, %v1167
    %1232 = vst [vmem:[#allocation9] sm:$0xf] %v1168
    %1233 = vst [vmem:[#allocation9 + $0x4] sm:$0xf] %v1169
    %1234 = vst [vmem:[#allocation9 + $0x8] sm:$0xf] %v1170
    %1235 = vst [vmem:[#allocation9 + $0xc] sm:$0xf] %v1171
    %1236 = vst [vmem:[#allocation9 + $0x10] sm:$0xf] %v1172
    %1237 = vst [vmem:[#allocation9 + $0x14] sm:$0xf] %v1173
    %1238 = vst [vmem:[#allocation9 + $0x18] sm:$0xf] %v1174
    %1239 = vst [vmem:[#allocation9 + $0x1c] sm:$0xf] %v1175
    %1240 = vst [vmem:[#allocation9 + $0x20] sm:$0xf] %v1176
    %1241 = vst [vmem:[#allocation9 + $0x24] sm:$0xf] %v1177
    %1242 = vst [vmem:[#allocation9 + $0x28] sm:$0xf] %v1178
    %1243 = vst [vmem:[#allocation9 + $0x2c] sm:$0xf] %v1179
    %1244 = vst [vmem:[#allocation9 + $0x30] sm:$0xf] %v1180
    %1245 = vst [vmem:[#allocation9 + $0x34] sm:$0xf] %v1181
    %1246 = vst [vmem:[#allocation9 + $0x38] sm:$0xf] %v1182
    %1247 = vst [vmem:[#allocation9 + $0x3c] sm:$0xf] %v1183
    %1248 = vst [vmem:[#allocation9 + $0x40] sm:$0xf] %v1184
    %1249 = vst [vmem:[#allocation9 + $0x44] sm:$0xf] %v1185
    %1250 = vst [vmem:[#allocation9 + $0x48] sm:$0xf] %v1186
    %1251 = vst [vmem:[#allocation9 + $0x4c] sm:$0xf] %v1187
    %1252 = vst [vmem:[#allocation9 + $0x50] sm:$0xf] %v1188
    %1253 = vst [vmem:[#allocation9 + $0x54] sm:$0xf] %v1189
    %1254 = vst [vmem:[#allocation9 + $0x58] sm:$0xf] %v1190
    %1255 = vst [vmem:[#allocation9 + $0x5c] sm:$0xf] %v1191
    %1256 = vst [vmem:[#allocation9 + $0x60] sm:$0xf] %v1192
    %1257 = vst [vmem:[#allocation9 + $0x64] sm:$0xf] %v1193
    %1258 = vst [vmem:[#allocation9 + $0x68] sm:$0xf] %v1194
    %1259 = vst [vmem:[#allocation9 + $0x6c] sm:$0xf] %v1195
    %1260 = vst [vmem:[#allocation9 + $0x70] sm:$0xf] %v1196
    %1261 = vst [vmem:[#allocation9 + $0x74] sm:$0xf] %v1197
    %1262 = vst [vmem:[#allocation9 + $0x78] sm:$0xf] %v1198
    %1263 = vst [vmem:[#allocation9 + $0x7c] sm:$0xf] %v1199
    %v1264 = vpack.c.bf16 %v821, %v818
    %v1265 = vpack.c.bf16 %v829, %v826
    %v1266 = vpack.c.bf16 %v837, %v834
    %v1267 = vpack.c.bf16 %v845, %v842
    %v1268 = vpack.c.bf16 %v853, %v850
    %v1269 = vpack.c.bf16 %v861, %v858
    %v1270 = vpack.c.bf16 %v869, %v866
    %v1271 = vpack.c.bf16 %v877, %v874
    %v1272 = vpack.c.bf16 %v885, %v882
    %v1273 = vpack.c.bf16 %v893, %v890
    %v1274 = vpack.c.bf16 %v901, %v898
    %v1275 = vpack.c.bf16 %v909, %v906
    %v1276 = vpack.c.bf16 %v917, %v914
    %v1277 = vpack.c.bf16 %v925, %v922
    %v1278 = vpack.c.bf16 %v933, %v930
    %v1279 = vpack.c.bf16 %v941, %v938
    %v1296 = vunpack.c.l.b16 %v1264
    %v1297 = vunpack.c.h.b16 %v1264
    %v1298 = vunpack.c.l.b16 %v1265
    %v1299 = vunpack.c.h.b16 %v1265
    %v1300 = vunpack.c.l.b16 %v1266
    %v1301 = vunpack.c.h.b16 %v1266
    %v1302 = vunpack.c.l.b16 %v1267
    %v1303 = vunpack.c.h.b16 %v1267
    %v1304 = vunpack.c.l.b16 %v1268
    %v1305 = vunpack.c.h.b16 %v1268
    %v1306 = vunpack.c.l.b16 %v1269
    %v1307 = vunpack.c.h.b16 %v1269
    %v1308 = vunpack.c.l.b16 %v1270
    %v1309 = vunpack.c.h.b16 %v1270
    %v1310 = vunpack.c.l.b16 %v1271
    %v1311 = vunpack.c.h.b16 %v1271
    %v1312 = vunpack.c.l.b16 %v1272
    %v1313 = vunpack.c.h.b16 %v1272
    %v1314 = vunpack.c.l.b16 %v1273
    %v1315 = vunpack.c.h.b16 %v1273
    %v1316 = vunpack.c.l.b16 %v1274
    %v1317 = vunpack.c.h.b16 %v1274
    %v1318 = vunpack.c.l.b16 %v1275
    %v1319 = vunpack.c.h.b16 %v1275
    %v1320 = vunpack.c.l.b16 %v1276
    %v1321 = vunpack.c.h.b16 %v1276
    %v1322 = vunpack.c.l.b16 %v1277
    %v1323 = vunpack.c.h.b16 %v1277
    %v1324 = vunpack.c.l.b16 %v1278
    %v1325 = vunpack.c.h.b16 %v1278
    %v1326 = vunpack.c.l.b16 %v1279
    %v1327 = vunpack.c.h.b16 %v1279
    %v1328 = vpack.c.b16 %v1296, %v1296
    %v1329 = vpack.c.b16 %v1297, %v1297
    %v1330 = vpack.c.b16 %v1298, %v1298
    %v1331 = vpack.c.b16 %v1299, %v1299
    %v1332 = vpack.c.b16 %v1300, %v1300
    %v1333 = vpack.c.b16 %v1301, %v1301
    %v1334 = vpack.c.b16 %v1302, %v1302
    %v1335 = vpack.c.b16 %v1303, %v1303
    %v1336 = vpack.c.b16 %v1304, %v1304
    %v1337 = vpack.c.b16 %v1305, %v1305
    %v1338 = vpack.c.b16 %v1306, %v1306
    %v1339 = vpack.c.b16 %v1307, %v1307
    %v1340 = vpack.c.b16 %v1308, %v1308
    %v1341 = vpack.c.b16 %v1309, %v1309
    %v1342 = vpack.c.b16 %v1310, %v1310
    %v1343 = vpack.c.b16 %v1311, %v1311
    %v1344 = vpack.c.b16 %v1312, %v1312
    %v1345 = vpack.c.b16 %v1313, %v1313
    %v1346 = vpack.c.b16 %v1314, %v1314
    %v1347 = vpack.c.b16 %v1315, %v1315
    %v1348 = vpack.c.b16 %v1316, %v1316
    %v1349 = vpack.c.b16 %v1317, %v1317
    %v1350 = vpack.c.b16 %v1318, %v1318
    %v1351 = vpack.c.b16 %v1319, %v1319
    %v1352 = vpack.c.b16 %v1320, %v1320
    %v1353 = vpack.c.b16 %v1321, %v1321
    %v1354 = vpack.c.b16 %v1322, %v1322
    %v1355 = vpack.c.b16 %v1323, %v1323
    %v1356 = vpack.c.b16 %v1324, %v1324
    %v1357 = vpack.c.b16 %v1325, %v1325
    %v1358 = vpack.c.b16 %v1326, %v1326
    %v1359 = vpack.c.b16 %v1327, %v1327
    %1392 = vst [vmem:[#allocation11] sm:$0xf] %v1328
    %1393 = vst [vmem:[#allocation11 + $0x4] sm:$0xf] %v1329
    %1394 = vst [vmem:[#allocation11 + $0x8] sm:$0xf] %v1330
    %1395 = vst [vmem:[#allocation11 + $0xc] sm:$0xf] %v1331
    %1396 = vst [vmem:[#allocation11 + $0x10] sm:$0xf] %v1332
    %1397 = vst [vmem:[#allocation11 + $0x14] sm:$0xf] %v1333
    %1398 = vst [vmem:[#allocation11 + $0x18] sm:$0xf] %v1334
    %1399 = vst [vmem:[#allocation11 + $0x1c] sm:$0xf] %v1335
    %1400 = vst [vmem:[#allocation11 + $0x20] sm:$0xf] %v1336
    %1401 = vst [vmem:[#allocation11 + $0x24] sm:$0xf] %v1337
    %1402 = vst [vmem:[#allocation11 + $0x28] sm:$0xf] %v1338
    %1403 = vst [vmem:[#allocation11 + $0x2c] sm:$0xf] %v1339
    %1404 = vst [vmem:[#allocation11 + $0x30] sm:$0xf] %v1340
    %1405 = vst [vmem:[#allocation11 + $0x34] sm:$0xf] %v1341
    %1406 = vst [vmem:[#allocation11 + $0x38] sm:$0xf] %v1342
    %1407 = vst [vmem:[#allocation11 + $0x3c] sm:$0xf] %v1343
    %1408 = vst [vmem:[#allocation11 + $0x40] sm:$0xf] %v1344
    %1409 = vst [vmem:[#allocation11 + $0x44] sm:$0xf] %v1345
    %1410 = vst [vmem:[#allocation11 + $0x48] sm:$0xf] %v1346
    %1411 = vst [vmem:[#allocation11 + $0x4c] sm:$0xf] %v1347
    %1412 = vst [vmem:[#allocation11 + $0x50] sm:$0xf] %v1348
    %1413 = vst [vmem:[#allocation11 + $0x54] sm:$0xf] %v1349
    %1414 = vst [vmem:[#allocation11 + $0x58] sm:$0xf] %v1350
    %1415 = vst [vmem:[#allocation11 + $0x5c] sm:$0xf] %v1351
    %1416 = vst [vmem:[#allocation11 + $0x60] sm:$0xf] %v1352
    %1417 = vst [vmem:[#allocation11 + $0x64] sm:$0xf] %v1353
    %1418 = vst [vmem:[#allocation11 + $0x68] sm:$0xf] %v1354
    %1419 = vst [vmem:[#allocation11 + $0x6c] sm:$0xf] %v1355
    %1420 = vst [vmem:[#allocation11 + $0x70] sm:$0xf] %v1356
    %1421 = vst [vmem:[#allocation11 + $0x74] sm:$0xf] %v1357
    %1422 = vst [vmem:[#allocation11 + $0x78] sm:$0xf] %v1358
    %1423 = vst [vmem:[#allocation11 + $0x7c] sm:$0xf] %v1359
    // Predicated region
    $region26: #{tpu_custom_call.1} parent=1 // pred_check
      _
    $region27: #{tpu_custom_call.1} parent=1 // pred_check_branch
      %1425 = sbr.rel (0) target = $region29
    $region28: #{tpu_custom_call.1} parent=1 // pred_region
      %s1427 = ssub.s32 2048, 2048
      %1428 = vsyncadd [#allocation4], %s1427
      %s1429 = sshll.u32 [#allocation8], 4
      %s1430 = int_to_ptr.vmem [resolvable:$true] %s1429
      %1435 = dma.vmem_to_hbm [thread:$0]  %s1430, 2048, %s3, [#allocation4], 64, 64, 4
    $region29: #{tpu_custom_call.1} parent=1 // pred_fallthru
      _
    // Predicated region
    $region30: #{tpu_custom_call.1} parent=1 // pred_check
      _
    $region31: #{tpu_custom_call.1} parent=1 // pred_check_branch
      %1437 = sbr.rel (0) target = $region33
    $region32: #{tpu_custom_call.1} parent=1 // pred_region
      %s1439 = ssub.s32 2048, 2048
      %1440 = vsyncadd [#allocation10], %s1439
      %s1441 = sshll.u32 [#allocation9], 4
      %s1442 = int_to_ptr.vmem [resolvable:$true] %s1441
      %1447 = dma.vmem_to_hbm [thread:$0]  %s1442, 2048, %s4, [#allocation10], 64, 64, 4
    $region33: #{tpu_custom_call.1} parent=1 // pred_fallthru
      _
    // Predicated region
    $region34: #{tpu_custom_call.1} parent=1 // pred_check
      _
    $region35: #{tpu_custom_call.1} parent=1 // pred_check_branch
      %1449 = sbr.rel (0) target = $region37
    $region36: #{tpu_custom_call.1} parent=1 // pred_region
      %s1451 = ssub.s32 2048, 2048
      %1452 = vsyncadd [#allocation10], %s1451
      %s1453 = sshll.u32 [#allocation11], 4
      %s1454 = int_to_ptr.vmem [resolvable:$true] %s1453
      %1459 = dma.vmem_to_hbm [thread:$0]  %s1454, 2048, %s5, [#allocation10], 64, 64, 4
    $region37: #{tpu_custom_call.1} parent=1 // pred_fallthru
      _
    // Predicated region
    $region38: #{tpu_custom_call.1} parent=1 // pred_check
      _
    $region39: #{tpu_custom_call.1} parent=1 // pred_check_branch
      %1461 = sbr.rel (0) target = $region41
    $region40: #{tpu_custom_call.1} parent=1 // pred_region
      %1462 = dma.done [#allocation4], 2048
    $region41: #{tpu_custom_call.1} parent=1 // pred_fallthru
      _
    // Predicated region
    $region42: #{tpu_custom_call.1} parent=1 // pred_check
      _
    $region43: #{tpu_custom_call.1} parent=1 // pred_check_branch
      %1464 = sbr.rel (0) target = $region45
    $region44: #{tpu_custom_call.1} parent=1 // pred_region
      %1465 = dma.done [#allocation10], 2048
    $region45: #{tpu_custom_call.1} parent=1 // pred_fallthru
      _
    // Predicated region
    $region46: #{tpu_custom_call.1} parent=1 // pred_check
      _
    $region47: #{tpu_custom_call.1} parent=1 // pred_check_branch
      %1467 = sbr.rel (0) target = $region49
    $region48: #{tpu_custom_call.1} parent=1 // pred_region
      %1468 = dma.done [#allocation10], 2048
    $region49: #{tpu_custom_call.1} parent=1 // pred_fallthru
      _
    %1469 = vsyncpa [#allocation3], 1
    %1470 = vsyncpa [#allocation6], 1
    %1471 = vsyncpa [#allocation4], 1
    %1472 = vsyncpa [#allocation10], 1

</llo_original>
